<compile_context>
chip_gen: v7x
topology: tpu7x:2x2x1
jax: 0.10.0
libtpu: 0.0.40
codegen_flags: <defaults>
</compile_context>

<pallas_src>
import functools

import jax
import jax.numpy as jnp
from jax.experimental import pallas as pl
from jax.experimental.pallas import tpu as pltpu

_LANE = 128


def _round_up(x, m):
    return ((x + m - 1) // m) * m


def _pad2(a, rows, cols, dtype=None):
    """Zero-pad a 2-D array to (rows, cols), optionally casting dtype."""
    out_dtype = a.dtype if dtype is None else dtype
    out = jnp.zeros((rows, cols), out_dtype)
    return out.at[: a.shape[0], : a.shape[1]].set(a.astype(out_dtype))


# ---------------------------------------------------------------------------
# Pallas kernels
# ---------------------------------------------------------------------------
def sage_conv_kernel(a_ref, xk_ref, xi_ref, wlr_ref, b_ref, o_ref, fused_ref,
                     *, apply_relu):
    """One SAGEConv layer, tiled over (dst rows, src cols).

    fused_ref is a (tm, 2*din_p) f32 scratch whose left half accumulates the
    mean aggregation A_tile @ X_tile over the reduction axis and whose right
    half holds the root features x_i, so the finalize step is a single fused
    matmul against Wlr = [Wl ; Wr].
    """
    din_p = xi_ref.shape[1]
    k = pl.program_id(1)

    @pl.when(k == 0)
    def _init():
        fused_ref[:, :din_p] = jnp.zeros((fused_ref.shape[0], din_p), jnp.float32)
        fused_ref[:, din_p:] = xi_ref[...].astype(jnp.float32)

    # mean aggregation: acc += A_norm[dst_tile, src_tile] @ X[src_tile]
    fused_ref[:, :din_p] += jnp.dot(
        a_ref[...], xk_ref[...], preferred_element_type=jnp.float32)

    @pl.when(k == pl.num_programs(1) - 1)
    def _finalize():
        out = jnp.dot(fused_ref[...].astype(wlr_ref.dtype), wlr_ref[...],
                      preferred_element_type=jnp.float32)
        out = out + b_ref[...]
        if apply_relu:
            out = jnp.maximum(out, 0.0)
        o_ref[...] = out.astype(o_ref.dtype)


def edge_predictor_kernel(hs_ref, hd_ref, wt_ref, wb_ref, b_ref, o_ref):
    """Edge logits for a tile of edges: h[src] @ We_top + h[dst] @ We_bot + b."""
    out = jnp.dot(hs_ref[...], wt_ref[...], preferred_element_type=jnp.float32)
    out = out + jnp.dot(hd_ref[...], wb_ref[...], preferred_element_type=jnp.float32)
    o_ref[...] = (out + b_ref[...]).astype(o_ref.dtype)


# ---------------------------------------------------------------------------
# Wrappers (BlockSpecs, grids, padding, parameter plumbing)
# ---------------------------------------------------------------------------
def sage_conv(a_norm, x, wlr, b, *, tm, tk, apply_relu):
    """a_norm: (n_pad, n_pad) bf16, x: (n_pad, din_p) bf16,
    wlr: (2*din_p, h_p) bf16, b: (1, h_p) f32  ->  (n_pad, h_p) bf16."""
    n_pad = a_norm.shape[0]
    din_p = x.shape[1]
    h_p = wlr.shape[1]
    grid = (n_pad // tm, n_pad // tk)

    flops = 2 * n_pad * n_pad * din_p + 2 * n_pad * (2 * din_p) * h_p
    bytes_accessed = (n_pad * n_pad * 2
                      + (n_pad // tm) * n_pad * din_p * 2
                      + n_pad * din_p * 2
                      + 2 * din_p * h_p * 2
                      + n_pad * h_p * 2)

    kernel = functools.partial(sage_conv_kernel, apply_relu=apply_relu)
    return pl.pallas_call(
        kernel,
        out_shape=jax.ShapeDtypeStruct((n_pad, h_p), jnp.bfloat16),
        grid=grid,
        in_specs=[
            pl.BlockSpec((tm, tk), lambda i, k: (i, k)),        # A_norm tile
            pl.BlockSpec((tk, din_p), lambda i, k: (k, 0)),     # X (src rows)
            pl.BlockSpec((tm, din_p), lambda i, k: (i, 0)),     # X (dst/root rows)
            pl.BlockSpec((2 * din_p, h_p), lambda i, k: (0, 0)),  # [Wl ; Wr]
            pl.BlockSpec((1, h_p), lambda i, k: (0, 0)),        # bias
        ],
        out_specs=pl.BlockSpec((tm, h_p), lambda i, k: (i, 0)),
        scratch_shapes=[pltpu.VMEM((tm, 2 * din_p), jnp.float32)],
        compiler_params=pltpu.CompilerParams(
            dimension_semantics=("parallel", "arbitrary")),
        cost_estimate=pl.CostEstimate(flops=flops, transcendentals=0,
                                      bytes_accessed=bytes_accessed),
    )(a_norm, x, x, wlr, b)


def edge_predictor(hs, hd, we_top, we_bot, b, *, te):
    """hs/hd: (e_pad, h_p) bf16 gathered node embeddings; returns (e_pad, out_p) f32."""
    e_pad, h_p = hs.shape
    out_p = we_top.shape[1]
    grid = (e_pad // te,)

    flops = 4 * e_pad * h_p * out_p
    bytes_accessed = 2 * e_pad * h_p * 2 + 2 * h_p * out_p * 2 + e_pad * out_p * 4

    return pl.pallas_call(
        edge_predictor_kernel,
        out_shape=jax.ShapeDtypeStruct((e_pad, out_p), jnp.float32),
        grid=grid,
        in_specs=[
            pl.BlockSpec((te, h_p), lambda i: (i, 0)),
            pl.BlockSpec((te, h_p), lambda i: (i, 0)),
            pl.BlockSpec((h_p, out_p), lambda i: (0, 0)),
            pl.BlockSpec((h_p, out_p), lambda i: (0, 0)),
            pl.BlockSpec((1, out_p), lambda i: (0, 0)),
        ],
        out_specs=pl.BlockSpec((te, out_p), lambda i: (i, 0)),
        compiler_params=pltpu.CompilerParams(dimension_semantics=("parallel",)),
        cost_estimate=pl.CostEstimate(flops=flops, transcendentals=0,
                                      bytes_accessed=bytes_accessed),
    )(hs, hd, we_top, we_bot, b)


def build_mean_adjacency(edge_index, n_pad):
    """Dense row-normalized adjacency A[dst, src] = 1/in_deg(dst), bf16, padded."""
    src, dst = edge_index[0], edge_index[1]
    a = jnp.zeros((n_pad, n_pad), jnp.float32)
    a = a.at[dst, src].add(1.0)
    deg = jnp.maximum(a.sum(axis=1, keepdims=True), 1.0)
    return (a / deg).astype(jnp.bfloat16)


def gnn_forward(params, x, edge_index):
    n, din = x.shape
    h_dim = params["wl1"].shape[1]
    out_dim = params["we"].shape[1]

    # ----- padded / lane-dense shapes -------------------------------------
    tm = 256 if n > 128 else 128          # row / reduction tile for SAGE layers
    n_pad = _round_up(n, tm)
    din_p = _round_up(din, _LANE)
    h_p = _round_up(h_dim, _LANE)
    out_p = _round_up(out_dim, _LANE)

    a_norm = build_mean_adjacency(edge_index, n_pad)               # reused by both layers
    x_p = _pad2(x, n_pad, din_p, jnp.bfloat16)

    wlr1 = jnp.concatenate([_pad2(params["wl1"], din_p, h_p, jnp.bfloat16),
                            _pad2(params["wr1"], din_p, h_p, jnp.bfloat16)], axis=0)
    b1 = _pad2(params["b1"], 1, h_p)
    wlr2 = jnp.concatenate([_pad2(params["wl2"], h_p, h_p, jnp.bfloat16),
                            _pad2(params["wr2"], h_p, h_p, jnp.bfloat16)], axis=0)
    b2 = _pad2(params["b2"], 1, h_p)

    # conv1 + relu  (dropout = identity in eval mode), then conv2
    h = sage_conv(a_norm, x_p, wlr1, b1, tm=tm, tk=tm, apply_relu=True)
    h = sage_conv(a_norm, h, wlr2, b2, tm=tm, tk=tm, apply_relu=False)

    # ----- edge predictor: split-weight form, no [E, 2H] concat -----------
    src, dst = edge_index[0], edge_index[1]
    e = src.shape[0]
    te = 256 if e > 128 else 128
    e_pad = _round_up(e, te)
    src_p = jnp.zeros((e_pad,), jnp.int32).at[:e].set(src.astype(jnp.int32))
    dst_p = jnp.zeros((e_pad,), jnp.int32).at[:e].set(dst.astype(jnp.int32))
    hs = jnp.take(h, src_p, axis=0)   # gather glue
    hd = jnp.take(h, dst_p, axis=0)
    # TODO(synk): move the row gather into the predictor kernel
    #             (scalar-prefetched indices + DMA gather) to avoid the two
    #             intermediate [E, H] arrays.

    we_top = _pad2(params["we"][:h_dim], h_p, out_p, jnp.bfloat16)
    we_bot = _pad2(params["we"][h_dim:], h_p, out_p, jnp.bfloat16)
    be = _pad2(params["be"], 1, out_p)

    logits = edge_predictor(hs, hd, we_top, we_bot, be, te=te)
    return logits[:e, :out_dim]


# ---------------------------------------------------------------------------
# Deterministic parameter init + demo run
# ---------------------------------------------------------------------------
def init_params(key, input_dim, hidden_dim, output_dim):
    ks = jax.random.split(key, 7)

    def lin(k, fan_in, fan_out):
        scale = 1.0 / jnp.sqrt(jnp.float32(fan_in))
        return jax.random.uniform(k, (fan_in, fan_out), jnp.float32, -scale, scale)

    return {
        # SAGEConv 1
        "wl1": lin(ks[0], input_dim, hidden_dim),
        "wr1": lin(ks[1], input_dim, hidden_dim),
        "b1": jnp.zeros((1, hidden_dim), jnp.float32),
        # SAGEConv 2
        "wl2": lin(ks[2], hidden_dim, hidden_dim),
        "wr2": lin(ks[3], hidden_dim, hidden_dim),
        "b2": jnp.zeros((1, hidden_dim), jnp.float32),
        # edge predictor: Linear(2*hidden, output_dim)
        "we": lin(ks[4], 2 * hidden_dim, output_dim),
        "be": jax.random.uniform(
            ks[5], (1, output_dim), jnp.float32,
            -1.0 / jnp.sqrt(2.0 * hidden_dim), 1.0 / jnp.sqrt(2.0 * hidden_dim)),
    }


if __name__ == "__main__":
    INPUT_DIM, HIDDEN_DIM, OUTPUT_DIM = 8, 32, 4
    NUM_NODES, NUM_EDGES = 16, 32

    key = jax.random.PRNGKey(0)
    k_x, k_src, k_dst, k_p = jax.random.split(key, 4)

    x = jax.random.normal(k_x, (NUM_NODES, INPUT_DIM), jnp.float32)
    edge_index = jnp.stack([
        jax.random.randint(k_src, (NUM_EDGES,), 0, NUM_NODES),
        jax.random.randint(k_dst, (NUM_EDGES,), 0, NUM_NODES),
    ])  # [2, E]

    params = init_params(k_p, INPUT_DIM, HIDDEN_DIM, OUTPUT_DIM)

    out = jax.jit(gnn_forward)(params, x, edge_index)
    jax.block_until_ready(out)

    assert out.shape == (NUM_EDGES, OUTPUT_DIM), out.shape
    assert bool(jnp.all(jnp.isfinite(out)))
    print("KERNEL_OK")
</pallas_src>

<mosaic_0001>
module attributes {stable_mosaic.version = 11 : i64} {
  func.func private @main(%arg0: i32) attributes {dimension_semantics = [#tpu.dimension_semantics<core_parallel>], iteration_bounds = array<i64: 2>, tpu.core_type = #tpu.core_type<sc_scalar_subcore>, window_params = []} {
    return
  }
}

module attributes {stable_mosaic.version = 11 : i64} {
  func.func private @main(%arg0: i32) attributes {dimension_semantics = [#tpu.dimension_semantics<core_parallel>], iteration_bounds = array<i64: 2>, tpu.core_type = #tpu.core_type<sc_scalar_subcore>, window_params = []} {
    return
  }
}

module attributes {stable_mosaic.version = 11 : i64} {
  func.func @sage_conv_kernel(%arg0: i32, %arg1: i32, %arg2: memref<128x128xbf16, #tpu.memory_space<vmem>>, %arg3: memref<128x128xbf16, #tpu.memory_space<vmem>>, %arg4: memref<128x128xbf16, #tpu.memory_space<vmem>>, %arg5: memref<256x128xbf16, #tpu.memory_space<vmem>>, %arg6: memref<1x128xf32, #tpu.memory_space<vmem>>, %arg7: memref<128x128xbf16, #tpu.memory_space<vmem>>, %arg8: memref<128x256xf32, #tpu.memory_space<vmem>>) attributes {dimension_semantics = [#tpu.dimension_semantics<parallel>, #tpu.dimension_semantics<arbitrary>], iteration_bounds = array<i64: 1, 1>, scalar_prefetch = 0 : i64, scratch_operands = 1 : i64, tpu.core_type = #tpu.core_type<tc>, window_params = [{transform_indices = @transform_0, window_bounds = array<i64: 128, 128>}, {transform_indices = @transform_1, window_bounds = array<i64: 128, 128>}, {transform_indices = @transform_2, window_bounds = array<i64: 128, 128>}, {pipeline_mode = #tpu.pipeline_mode<synchronous>, transform_indices = @transform_3, window_bounds = array<i64: 256, 128>}, {pipeline_mode = #tpu.pipeline_mode<synchronous>, transform_indices = @transform_4, window_bounds = array<i64: 1, 128>}, {transform_indices = @transform_5, window_bounds = array<i64: 128, 128>}]} {
    %c0_i32 = arith.constant 0 : i32
    %0 = arith.cmpi eq, %arg1, %c0_i32 : i32
    %1 = arith.extui %0 : i1 to i32
    %c0_i32_0 = arith.constant 0 : i32
    %2 = arith.cmpi ne, %1, %c0_i32_0 : i32
    scf.if %2 {
      %cst_10 = arith.constant 0.000000e+00 : f32
      %12 = vector.broadcast %cst_10 : f32 to vector<128x128xf32>
      %c0_11 = arith.constant 0 : index
      %c0_12 = arith.constant 0 : index
      %13 = vector.load %arg8[%c0_11, %c0_12] : memref<128x256xf32, #tpu.memory_space<vmem>>, vector<128x128xf32>
      tpu.vector_store %arg8[%c0_11, %c0_12], %12 {strides = array<i32>} : memref<128x256xf32, #tpu.memory_space<vmem>>, vector<128x128xf32>,
      %c0_13 = arith.constant 0 : index
      %c0_14 = arith.constant 0 : index
      %14 = vector.load %arg4[%c0_13, %c0_14] : memref<128x128xbf16, #tpu.memory_space<vmem>>, vector<128x128xbf16>
      %15 = arith.extf %14 : vector<128x128xbf16> to vector<128x128xf32>
      %c0_15 = arith.constant 0 : index
      %c128 = arith.constant 128 : index
      %16 = vector.load %arg8[%c0_15, %c128] : memref<128x256xf32, #tpu.memory_space<vmem>>, vector<128x128xf32>
      tpu.vector_store %arg8[%c0_15, %c128], %15 {strides = array<i32>} : memref<128x256xf32, #tpu.memory_space<vmem>>, vector<128x128xf32>,
    } else {
    }
    %c0 = arith.constant 0 : index
    %c0_1 = arith.constant 0 : index
    %3 = vector.load %arg8[%c0, %c0_1] : memref<128x256xf32, #tpu.memory_space<vmem>>, vector<128x128xf32>
    %c0_2 = arith.constant 0 : index
    %c0_3 = arith.constant 0 : index
    %4 = vector.load %arg2[%c0_2, %c0_3] : memref<128x128xbf16, #tpu.memory_space<vmem>>, vector<128x128xbf16>
    %c0_4 = arith.constant 0 : index
    %c0_5 = arith.constant 0 : index
    %5 = vector.load %arg3[%c0_4, %c0_5] : memref<128x128xbf16, #tpu.memory_space<vmem>>, vector<128x128xbf16>
    %cst = arith.constant dense<0.000000e+00> : vector<128x128xf32>
    %6 = tpu.matmul %4, %5, %cst {dimension_numbers = #tpu.dot_dimension_numbers<[1], [0], [0], [1], [0, 0, 1, 1], [], []>} : vector<128x128xbf16>, vector<128x128xbf16>, vector<128x128xf32> -> vector<128x128xf32>
    %7 = arith.addf %3, %6 : vector<128x128xf32>
    %c0_6 = arith.constant 0 : index
    %c0_7 = arith.constant 0 : index
    %8 = vector.load %arg8[%c0_6, %c0_7] : memref<128x256xf32, #tpu.memory_space<vmem>>, vector<128x128xf32>
    tpu.vector_store %arg8[%c0_6, %c0_7], %7 {strides = array<i32>} : memref<128x256xf32, #tpu.memory_space<vmem>>, vector<128x128xf32>,
    %c0_i32_8 = arith.constant 0 : i32
    %9 = arith.cmpi eq, %arg1, %c0_i32_8 : i32
    %10 = arith.extui %9 : i1 to i32
    %c0_i32_9 = arith.constant 0 : i32
    %11 = arith.cmpi ne, %10, %c0_i32_9 : i32
    scf.if %11 {
      %c0_10 = arith.constant 0 : index
      %c0_11 = arith.constant 0 : index
      %12 = vector.load %arg8[%c0_10, %c0_11] : memref<128x256xf32, #tpu.memory_space<vmem>>, vector<128x256xf32>
      %13 = arith.truncf %12 : vector<128x256xf32> to vector<128x256xbf16>
      %c0_12 = arith.constant 0 : index
      %c0_13 = arith.constant 0 : index
      %14 = vector.load %arg5[%c0_12, %c0_13] : memref<256x128xbf16, #tpu.memory_space<vmem>>, vector<256x128xbf16>
      %cst_14 = arith.constant dense<0.000000e+00> : vector<128x128xf32>
      %15 = tpu.matmul %13, %14, %cst_14 {dimension_numbers = #tpu.dot_dimension_numbers<[1], [0], [0], [1], [0, 0, 1, 1], [], []>} : vector<128x256xbf16>, vector<256x128xbf16>, vector<128x128xf32> -> vector<128x128xf32>
      %c0_15 = arith.constant 0 : index
      %c0_16 = arith.constant 0 : index
      %16 = vector.load %arg6[%c0_15, %c0_16] : memref<1x128xf32, #tpu.memory_space<vmem>>, vector<1x128xf32>
      %17 = vector.broadcast %16 : vector<1x128xf32> to vector<128x128xf32>
      %18 = arith.addf %15, %17 : vector<128x128xf32>
      %cst_17 = arith.constant 0.000000e+00 : f32
      %19 = vector.broadcast %cst_17 : f32 to vector<128x128xf32>
      %20 = arith.maximumf %18, %19 : vector<128x128xf32>
      %21 = arith.truncf %20 : vector<128x128xf32> to vector<128x128xbf16>
      %c0_18 = arith.constant 0 : index
      %c0_19 = arith.constant 0 : index
      %22 = vector.load %arg7[%c0_18, %c0_19] : memref<128x128xbf16, #tpu.memory_space<vmem>>, vector<128x128xbf16>
      tpu.vector_store %arg7[%c0_18, %c0_19], %21 {strides = array<i32>} : memref<128x128xbf16, #tpu.memory_space<vmem>>, vector<128x128xbf16>,
    } else {
    }
    return
  }
  func.func @transform_0(%arg0: i32, %arg1: i32) -> (i32, i32) {
    %c0_i32 = arith.constant 0 : i32
    return %arg0, %arg1 : i32, i32
  }
  func.func @transform_1(%arg0: i32, %arg1: i32) -> (i32, i32) {
    %c0_i32 = arith.constant 0 : i32
    %c0_i32_0 = arith.constant 0 : i32
    return %arg1, %c0_i32 : i32, i32
  }
  func.func @transform_2(%arg0: i32, %arg1: i32) -> (i32, i32) {
    %c0_i32 = arith.constant 0 : i32
    %c0_i32_0 = arith.constant 0 : i32
    return %arg0, %c0_i32 : i32, i32
  }
  func.func @transform_3(%arg0: i32, %arg1: i32) -> (i32, i32) {
    %c0_i32 = arith.constant 0 : i32
    %c0_i32_0 = arith.constant 0 : i32
    %c0_i32_1 = arith.constant 0 : i32
    return %c0_i32, %c0_i32_0 : i32, i32
  }
  func.func @transform_4(%arg0: i32, %arg1: i32) -> (i32, i32) {
    %c0_i32 = arith.constant 0 : i32
    %c0_i32_0 = arith.constant 0 : i32
    %c0_i32_1 = arith.constant 0 : i32
    return %c0_i32, %c0_i32_0 : i32, i32
  }
  func.func @transform_5(%arg0: i32, %arg1: i32) -> (i32, i32) {
    %c0_i32 = arith.constant 0 : i32
    %c0_i32_0 = arith.constant 0 : i32
    return %arg0, %c0_i32 : i32, i32
  }
}

module attributes {stable_mosaic.version = 11 : i64} {
  func.func @sage_conv_kernel(%arg0: i32, %arg1: i32, %arg2: memref<128x128xbf16, #tpu.memory_space<vmem>>, %arg3: memref<128x128xbf16, #tpu.memory_space<vmem>>, %arg4: memref<128x128xbf16, #tpu.memory_space<vmem>>, %arg5: memref<256x128xbf16, #tpu.memory_space<vmem>>, %arg6: memref<1x128xf32, #tpu.memory_space<vmem>>, %arg7: memref<128x128xbf16, #tpu.memory_space<vmem>>, %arg8: memref<128x256xf32, #tpu.memory_space<vmem>>) attributes {dimension_semantics = [#tpu.dimension_semantics<parallel>, #tpu.dimension_semantics<arbitrary>], iteration_bounds = array<i64: 1, 1>, scalar_prefetch = 0 : i64, scratch_operands = 1 : i64, tpu.core_type = #tpu.core_type<tc>, window_params = [{transform_indices = @transform_0, window_bounds = array<i64: 128, 128>}, {transform_indices = @transform_1, window_bounds = array<i64: 128, 128>}, {transform_indices = @transform_2, window_bounds = array<i64: 128, 128>}, {pipeline_mode = #tpu.pipeline_mode<synchronous>, transform_indices = @transform_3, window_bounds = array<i64: 256, 128>}, {pipeline_mode = #tpu.pipeline_mode<synchronous>, transform_indices = @transform_4, window_bounds = array<i64: 1, 128>}, {transform_indices = @transform_5, window_bounds = array<i64: 128, 128>}]} {
    %c0_i32 = arith.constant 0 : i32
    %0 = arith.cmpi eq, %arg1, %c0_i32 : i32
    %1 = arith.extui %0 : i1 to i32
    %c0_i32_0 = arith.constant 0 : i32
    %2 = arith.cmpi ne, %1, %c0_i32_0 : i32
    scf.if %2 {
      %cst_10 = arith.constant 0.000000e+00 : f32
      %12 = vector.broadcast %cst_10 : f32 to vector<128x128xf32>
      %c0_11 = arith.constant 0 : index
      %c0_12 = arith.constant 0 : index
      %13 = vector.load %arg8[%c0_11, %c0_12] : memref<128x256xf32, #tpu.memory_space<vmem>>, vector<128x128xf32>
      tpu.vector_store %arg8[%c0_11, %c0_12], %12 {strides = array<i32>} : memref<128x256xf32, #tpu.memory_space<vmem>>, vector<128x128xf32>,
      %c0_13 = arith.constant 0 : index
      %c0_14 = arith.constant 0 : index
      %14 = vector.load %arg4[%c0_13, %c0_14] : memref<128x128xbf16, #tpu.memory_space<vmem>>, vector<128x128xbf16>
      %15 = arith.extf %14 : vector<128x128xbf16> to vector<128x128xf32>
      %c0_15 = arith.constant 0 : index
      %c128 = arith.constant 128 : index
      %16 = vector.load %arg8[%c0_15, %c128] : memref<128x256xf32, #tpu.memory_space<vmem>>, vector<128x128xf32>
      tpu.vector_store %arg8[%c0_15, %c128], %15 {strides = array<i32>} : memref<128x256xf32, #tpu.memory_space<vmem>>, vector<128x128xf32>,
    } else {
    }
    %c0 = arith.constant 0 : index
    %c0_1 = arith.constant 0 : index
    %3 = vector.load %arg8[%c0, %c0_1] : memref<128x256xf32, #tpu.memory_space<vmem>>, vector<128x128xf32>
    %c0_2 = arith.constant 0 : index
    %c0_3 = arith.constant 0 : index
    %4 = vector.load %arg2[%c0_2, %c0_3] : memref<128x128xbf16, #tpu.memory_space<vmem>>, vector<128x128xbf16>
    %c0_4 = arith.constant 0 : index
    %c0_5 = arith.constant 0 : index
    %5 = vector.load %arg3[%c0_4, %c0_5] : memref<128x128xbf16, #tpu.memory_space<vmem>>, vector<128x128xbf16>
    %cst = arith.constant dense<0.000000e+00> : vector<128x128xf32>
    %6 = tpu.matmul %4, %5, %cst {dimension_numbers = #tpu.dot_dimension_numbers<[1], [0], [0], [1], [0, 0, 1, 1], [], []>} : vector<128x128xbf16>, vector<128x128xbf16>, vector<128x128xf32> -> vector<128x128xf32>
    %7 = arith.addf %3, %6 : vector<128x128xf32>
    %c0_6 = arith.constant 0 : index
    %c0_7 = arith.constant 0 : index
    %8 = vector.load %arg8[%c0_6, %c0_7] : memref<128x256xf32, #tpu.memory_space<vmem>>, vector<128x128xf32>
    tpu.vector_store %arg8[%c0_6, %c0_7], %7 {strides = array<i32>} : memref<128x256xf32, #tpu.memory_space<vmem>>, vector<128x128xf32>,
    %c0_i32_8 = arith.constant 0 : i32
    %9 = arith.cmpi eq, %arg1, %c0_i32_8 : i32
    %10 = arith.extui %9 : i1 to i32
    %c0_i32_9 = arith.constant 0 : i32
    %11 = arith.cmpi ne, %10, %c0_i32_9 : i32
    scf.if %11 {
      %c0_10 = arith.constant 0 : index
      %c0_11 = arith.constant 0 : index
      %12 = vector.load %arg8[%c0_10, %c0_11] : memref<128x256xf32, #tpu.memory_space<vmem>>, vector<128x256xf32>
      %13 = arith.truncf %12 : vector<128x256xf32> to vector<128x256xbf16>
      %c0_12 = arith.constant 0 : index
      %c0_13 = arith.constant 0 : index
      %14 = vector.load %arg5[%c0_12, %c0_13] : memref<256x128xbf16, #tpu.memory_space<vmem>>, vector<256x128xbf16>
      %cst_14 = arith.constant dense<0.000000e+00> : vector<128x128xf32>
      %15 = tpu.matmul %13, %14, %cst_14 {dimension_numbers = #tpu.dot_dimension_numbers<[1], [0], [0], [1], [0, 0, 1, 1], [], []>} : vector<128x256xbf16>, vector<256x128xbf16>, vector<128x128xf32> -> vector<128x128xf32>
      %c0_15 = arith.constant 0 : index
      %c0_16 = arith.constant 0 : index
      %16 = vector.load %arg6[%c0_15, %c0_16] : memref<1x128xf32, #tpu.memory_space<vmem>>, vector<1x128xf32>
      %17 = vector.broadcast %16 : vector<1x128xf32> to vector<128x128xf32>
      %18 = arith.addf %15, %17 : vector<128x128xf32>
      %19 = arith.truncf %18 : vector<128x128xf32> to vector<128x128xbf16>
      %c0_17 = arith.constant 0 : index
      %c0_18 = arith.constant 0 : index
      %20 = vector.load %arg7[%c0_17, %c0_18] : memref<128x128xbf16, #tpu.memory_space<vmem>>, vector<128x128xbf16>
      tpu.vector_store %arg7[%c0_17, %c0_18], %19 {strides = array<i32>} : memref<128x128xbf16, #tpu.memory_space<vmem>>, vector<128x128xbf16>,
    } else {
    }
    return
  }
  func.func @transform_0(%arg0: i32, %arg1: i32) -> (i32, i32) {
    %c0_i32 = arith.constant 0 : i32
    return %arg0, %arg1 : i32, i32
  }
  func.func @transform_1(%arg0: i32, %arg1: i32) -> (i32, i32) {
    %c0_i32 = arith.constant 0 : i32
    %c0_i32_0 = arith.constant 0 : i32
    return %arg1, %c0_i32 : i32, i32
  }
  func.func @transform_2(%arg0: i32, %arg1: i32) -> (i32, i32) {
    %c0_i32 = arith.constant 0 : i32
    %c0_i32_0 = arith.constant 0 : i32
    return %arg0, %c0_i32 : i32, i32
  }
  func.func @transform_3(%arg0: i32, %arg1: i32) -> (i32, i32) {
    %c0_i32 = arith.constant 0 : i32
    %c0_i32_0 = arith.constant 0 : i32
    %c0_i32_1 = arith.constant 0 : i32
    return %c0_i32, %c0_i32_0 : i32, i32
  }
  func.func @transform_4(%arg0: i32, %arg1: i32) -> (i32, i32) {
    %c0_i32 = arith.constant 0 : i32
    %c0_i32_0 = arith.constant 0 : i32
    %c0_i32_1 = arith.constant 0 : i32
    return %c0_i32, %c0_i32_0 : i32, i32
  }
  func.func @transform_5(%arg0: i32, %arg1: i32) -> (i32, i32) {
    %c0_i32 = arith.constant 0 : i32
    %c0_i32_0 = arith.constant 0 : i32
    return %arg0, %c0_i32 : i32, i32
  }
}

module attributes {stable_mosaic.version = 11 : i64} {
  func.func @edge_predictor_kernel(%arg0: i32, %arg1: memref<128x128xbf16, #tpu.memory_space<vmem>>, %arg2: memref<128x128xbf16, #tpu.memory_space<vmem>>, %arg3: memref<128x128xbf16, #tpu.memory_space<vmem>>, %arg4: memref<128x128xbf16, #tpu.memory_space<vmem>>, %arg5: memref<1x128xf32, #tpu.memory_space<vmem>>, %arg6: memref<128x128xf32, #tpu.memory_space<vmem>>) attributes {dimension_semantics = [#tpu.dimension_semantics<parallel>], iteration_bounds = array<i64: 1>, scalar_prefetch = 0 : i64, scratch_operands = 0 : i64, tpu.core_type = #tpu.core_type<tc>, window_params = [{transform_indices = @transform_0, window_bounds = array<i64: 128, 128>}, {transform_indices = @transform_1, window_bounds = array<i64: 128, 128>}, {pipeline_mode = #tpu.pipeline_mode<synchronous>, transform_indices = @transform_2, window_bounds = array<i64: 128, 128>}, {pipeline_mode = #tpu.pipeline_mode<synchronous>, transform_indices = @transform_3, window_bounds = array<i64: 128, 128>}, {pipeline_mode = #tpu.pipeline_mode<synchronous>, transform_indices = @transform_4, window_bounds = array<i64: 1, 128>}, {transform_indices = @transform_5, window_bounds = array<i64: 128, 128>}]} {
    %c0 = arith.constant 0 : index
    %c0_0 = arith.constant 0 : index
    %0 = vector.load %arg1[%c0, %c0_0] : memref<128x128xbf16, #tpu.memory_space<vmem>>, vector<128x128xbf16>
    %c0_1 = arith.constant 0 : index
    %c0_2 = arith.constant 0 : index
    %1 = vector.load %arg3[%c0_1, %c0_2] : memref<128x128xbf16, #tpu.memory_space<vmem>>, vector<128x128xbf16>
    %cst = arith.constant dense<0.000000e+00> : vector<128x128xf32>
    %2 = tpu.matmul %0, %1, %cst {dimension_numbers = #tpu.dot_dimension_numbers<[1], [0], [0], [1], [0, 0, 1, 1], [], []>} : vector<128x128xbf16>, vector<128x128xbf16>, vector<128x128xf32> -> vector<128x128xf32>
    %c0_3 = arith.constant 0 : index
    %c0_4 = arith.constant 0 : index
    %3 = vector.load %arg2[%c0_3, %c0_4] : memref<128x128xbf16, #tpu.memory_space<vmem>>, vector<128x128xbf16>
    %c0_5 = arith.constant 0 : index
    %c0_6 = arith.constant 0 : index
    %4 = vector.load %arg4[%c0_5, %c0_6] : memref<128x128xbf16, #tpu.memory_space<vmem>>, vector<128x128xbf16>
    %cst_7 = arith.constant dense<0.000000e+00> : vector<128x128xf32>
    %5 = tpu.matmul %3, %4, %cst_7 {dimension_numbers = #tpu.dot_dimension_numbers<[1], [0], [0], [1], [0, 0, 1, 1], [], []>} : vector<128x128xbf16>, vector<128x128xbf16>, vector<128x128xf32> -> vector<128x128xf32>
    %6 = arith.addf %2, %5 : vector<128x128xf32>
    %c0_8 = arith.constant 0 : index
    %c0_9 = arith.constant 0 : index
    %7 = vector.load %arg5[%c0_8, %c0_9] : memref<1x128xf32, #tpu.memory_space<vmem>>, vector<1x128xf32>
    %8 = vector.broadcast %7 : vector<1x128xf32> to vector<128x128xf32>
    %9 = arith.addf %6, %8 : vector<128x128xf32>
    %c0_10 = arith.constant 0 : index
    %c0_11 = arith.constant 0 : index
    %10 = vector.load %arg6[%c0_10, %c0_11] : memref<128x128xf32, #tpu.memory_space<vmem>>, vector<128x128xf32>
    tpu.vector_store %arg6[%c0_10, %c0_11], %9 {strides = array<i32>} : memref<128x128xf32, #tpu.memory_space<vmem>>, vector<128x128xf32>,
    return
  }
  func.func @transform_0(%arg0: i32) -> (i32, i32) {
    %c0_i32 = arith.constant 0 : i32
    %c0_i32_0 = arith.constant 0 : i32
    return %arg0, %c0_i32 : i32, i32
  }
  func.func @transform_1(%arg0: i32) -> (i32, i32) {
    %c0_i32 = arith.constant 0 : i32
    %c0_i32_0 = arith.constant 0 : i32
    return %arg0, %c0_i32 : i32, i32
  }
  func.func @transform_2(%arg0: i32) -> (i32, i32) {
    %c0_i32 = arith.constant 0 : i32
    %c0_i32_0 = arith.constant 0 : i32
    %c0_i32_1 = arith.constant 0 : i32
    return %c0_i32, %c0_i32_0 : i32, i32
  }
  func.func @transform_3(%arg0: i32) -> (i32, i32) {
    %c0_i32 = arith.constant 0 : i32
    %c0_i32_0 = arith.constant 0 : i32
    %c0_i32_1 = arith.constant 0 : i32
    return %c0_i32, %c0_i32_0 : i32, i32
  }
  func.func @transform_4(%arg0: i32) -> (i32, i32) {
    %c0_i32 = arith.constant 0 : i32
    %c0_i32_0 = arith.constant 0 : i32
    %c0_i32_1 = arith.constant 0 : i32
    return %c0_i32, %c0_i32_0 : i32, i32
  }
  func.func @transform_5(%arg0: i32) -> (i32, i32) {
    %c0_i32 = arith.constant 0 : i32
    %c0_i32_0 = arith.constant 0 : i32
    return %arg0, %c0_i32 : i32, i32
  }
}

</mosaic_0001>

<llo_original>
// kernel: gnn_forward.5
$region0: #{gnn_forward.5}
  #allocation0 [shape = 'u32[]', space=smem, size = 0x4, offset = 0x4, fixed_abs, tag = 'smem constant byte address 0x4 - core index']
  #allocation1 [shape = 'u32[144,128]{1,0:T(1,128)}', space=vmem, size = 0x12000, scoped, tag = 'internal scratch']
  %s0 = inlined_call_operand.vmem [shape: bf16[128,128], index: 0, kind: input, shape index: {}]
  %s1 = inlined_call_operand.vmem [shape: bf16[128,128], index: 1, kind: input, shape index: {}]
  %s2 = inlined_call_operand.vmem [shape: bf16[128,128], index: 2, kind: input, shape index: {}]
  %s3 = inlined_call_operand.vmem [shape: bf16[128,128], index: 3, kind: input, shape index: {}]
  %s4 = inlined_call_operand.vmem [shape: f32[1,128], index: 4, kind: input, shape index: {}]
  %s5 = inlined_call_operand.vmem [shape: f32[128,128], index: 5, kind: output, shape index: {}]
  %s6 = sld [smem:[#allocation0]]
  $region30: #{gnn_forward.5} parent=0
    _
  %s8 = ssub.s32 1, %s6
  %s9 = scalar_select 0, %s8, %s6
  // Predicated region
  $region2: #{gnn_forward.5} parent=0 // pred_check
    _
  $region3: #{gnn_forward.5} parent=0 // pred_check_branch
    %11 = sbr.rel (0) target = $region5
  $region4: #{gnn_forward.5} parent=0 // pred_region
    _
  $region5: #{gnn_forward.5} parent=0 // pred_fallthru
    _
  // Predicated region
  $region6: #{gnn_forward.5} parent=0 // pred_check
    _
  $region7: #{gnn_forward.5} parent=0 // pred_check_branch
    %13 = sbr.rel (0) target = $region9
  $region8: #{gnn_forward.5} parent=0 // pred_region
    _
  $region9: #{gnn_forward.5} parent=0 // pred_fallthru
    _
  // Predicated region
  $region10: #{gnn_forward.5} parent=0 // pred_check
    _
  $region11: #{gnn_forward.5} parent=0 // pred_check_branch
    %15 = sbr.rel (0) target = $region13
  $region12: #{gnn_forward.5} parent=0 // pred_region
    _
  $region13: #{gnn_forward.5} parent=0 // pred_fallthru
    _
  // Predicated region
  $region14: #{gnn_forward.5} parent=0 // pred_check
    _
  $region15: #{gnn_forward.5} parent=0 // pred_check_branch
    %17 = sbr.rel (0) target = $region17
  $region16: #{gnn_forward.5} parent=0 // pred_region
    _
  $region17: #{gnn_forward.5} parent=0 // pred_fallthru
    _
  // Predicated region
  $region18: #{gnn_forward.5} parent=0 // pred_check
    _
  $region19: #{gnn_forward.5} parent=0 // pred_check_branch
    %19 = sbr.rel (0) target = $region21
  $region20: #{gnn_forward.5} parent=0 // pred_region
    _
  $region21: #{gnn_forward.5} parent=0 // pred_fallthru
    _
  %v21 = vld [vmem:[%s0] sm:$0xf]
  %v22 = vld [vmem:[%s0 + $0x4] sm:$0xf]
  %v23 = vld [vmem:[%s0 + $0x8] sm:$0xf]
  %v24 = vld [vmem:[%s0 + $0xc] sm:$0xf]
  %v25 = vld [vmem:[%s0 + $0x10] sm:$0xf]
  %v26 = vld [vmem:[%s0 + $0x14] sm:$0xf]
  %v27 = vld [vmem:[%s0 + $0x18] sm:$0xf]
  %v28 = vld [vmem:[%s0 + $0x1c] sm:$0xf]
  %v29 = vld [vmem:[%s0 + $0x20] sm:$0xf]
  %v30 = vld [vmem:[%s0 + $0x24] sm:$0xf]
  %v31 = vld [vmem:[%s0 + $0x28] sm:$0xf]
  %v32 = vld [vmem:[%s0 + $0x2c] sm:$0xf]
  %v33 = vld [vmem:[%s0 + $0x30] sm:$0xf]
  %v34 = vld [vmem:[%s0 + $0x34] sm:$0xf]
  %v35 = vld [vmem:[%s0 + $0x38] sm:$0xf]
  %v36 = vld [vmem:[%s0 + $0x3c] sm:$0xf]
  %v37 = vld [vmem:[%s2] sm:$0xf]
  %v38 = vld [vmem:[%s2 + $0x4] sm:$0xf]
  %v39 = vld [vmem:[%s2 + $0x8] sm:$0xf]
  %v40 = vld [vmem:[%s2 + $0xc] sm:$0xf]
  %v41 = vld [vmem:[%s2 + $0x10] sm:$0xf]
  %v42 = vld [vmem:[%s2 + $0x14] sm:$0xf]
  %v43 = vld [vmem:[%s2 + $0x18] sm:$0xf]
  %v44 = vld [vmem:[%s2 + $0x1c] sm:$0xf]
  %v45 = vld [vmem:[%s2 + $0x20] sm:$0xf]
  %v46 = vld [vmem:[%s2 + $0x24] sm:$0xf]
  %v47 = vld [vmem:[%s2 + $0x28] sm:$0xf]
  %v48 = vld [vmem:[%s2 + $0x2c] sm:$0xf]
  %v49 = vld [vmem:[%s2 + $0x30] sm:$0xf]
  %v50 = vld [vmem:[%s2 + $0x34] sm:$0xf]
  %v51 = vld [vmem:[%s2 + $0x38] sm:$0xf]
  %v52 = vld [vmem:[%s2 + $0x3c] sm:$0xf]
  %v53 = vld [vmem:[%s1] sm:$0xf]
  %v54 = vld [vmem:[%s1 + $0x4] sm:$0xf]
  %v55 = vld [vmem:[%s1 + $0x8] sm:$0xf]
  %v56 = vld [vmem:[%s1 + $0xc] sm:$0xf]
  %v57 = vld [vmem:[%s1 + $0x10] sm:$0xf]
  %v58 = vld [vmem:[%s1 + $0x14] sm:$0xf]
  %v59 = vld [vmem:[%s1 + $0x18] sm:$0xf]
  %v60 = vld [vmem:[%s1 + $0x1c] sm:$0xf]
  %v61 = vld [vmem:[%s1 + $0x20] sm:$0xf]
  %v62 = vld [vmem:[%s1 + $0x24] sm:$0xf]
  %v63 = vld [vmem:[%s1 + $0x28] sm:$0xf]
  %v64 = vld [vmem:[%s1 + $0x2c] sm:$0xf]
  %v65 = vld [vmem:[%s1 + $0x30] sm:$0xf]
  %v66 = vld [vmem:[%s1 + $0x34] sm:$0xf]
  %v67 = vld [vmem:[%s1 + $0x38] sm:$0xf]
  %v68 = vld [vmem:[%s1 + $0x3c] sm:$0xf]
  %v69 = vld [vmem:[%s3] sm:$0xf]
  %v70 = vld [vmem:[%s3 + $0x4] sm:$0xf]
  %v71 = vld [vmem:[%s3 + $0x8] sm:$0xf]
  %v72 = vld [vmem:[%s3 + $0xc] sm:$0xf]
  %v73 = vld [vmem:[%s3 + $0x10] sm:$0xf]
  %v74 = vld [vmem:[%s3 + $0x14] sm:$0xf]
  %v75 = vld [vmem:[%s3 + $0x18] sm:$0xf]
  %v76 = vld [vmem:[%s3 + $0x1c] sm:$0xf]
  %v77 = vld [vmem:[%s3 + $0x20] sm:$0xf]
  %v78 = vld [vmem:[%s3 + $0x24] sm:$0xf]
  %v79 = vld [vmem:[%s3 + $0x28] sm:$0xf]
  %v80 = vld [vmem:[%s3 + $0x2c] sm:$0xf]
  %v81 = vld [vmem:[%s3 + $0x30] sm:$0xf]
  %v82 = vld [vmem:[%s3 + $0x34] sm:$0xf]
  %v83 = vld [vmem:[%s3 + $0x38] sm:$0xf]
  %v84 = vld [vmem:[%s3 + $0x3c] sm:$0xf]
  %v101 = vunpack.c.l.b16 %v53
  %v102 = vunpack.c.l.b16 %v54
  %v103 = vunpack.c.l.b16 %v55
  %v104 = vunpack.c.l.b16 %v56
  %v105 = vunpack.c.l.b16 %v57
  %v106 = vunpack.c.l.b16 %v58
  %v107 = vunpack.c.l.b16 %v59
  %v108 = vunpack.c.l.b16 %v60
  %v109 = vunpack.c.l.b16 %v61
  %v110 = vunpack.c.l.b16 %v62
  %v111 = vunpack.c.l.b16 %v63
  %v112 = vunpack.c.l.b16 %v64
  %v113 = vunpack.c.l.b16 %v65
  %v114 = vunpack.c.l.b16 %v66
  %v115 = vunpack.c.l.b16 %v67
  %v116 = vunpack.c.l.b16 %v68
  %v117 = vpack.c.b16 %v102, %v101
  %v118 = vpack.c.b16 %v104, %v103
  %v119 = vpack.c.b16 %v106, %v105
  %v120 = vpack.c.b16 %v108, %v107
  %v121 = vpack.c.b16 %v110, %v109
  %v122 = vpack.c.b16 %v112, %v111
  %v123 = vpack.c.b16 %v114, %v113
  %v124 = vpack.c.b16 %v116, %v115
  %v149 = vunpack.c.l.b16 %v69
  %v150 = vunpack.c.l.b16 %v70
  %v151 = vunpack.c.l.b16 %v71
  %v152 = vunpack.c.l.b16 %v72
  %v153 = vunpack.c.l.b16 %v73
  %v154 = vunpack.c.l.b16 %v74
  %v155 = vunpack.c.l.b16 %v75
  %v156 = vunpack.c.l.b16 %v76
  %v157 = vunpack.c.l.b16 %v77
  %v158 = vunpack.c.l.b16 %v78
  %v159 = vunpack.c.l.b16 %v79
  %v160 = vunpack.c.l.b16 %v80
  %v161 = vunpack.c.l.b16 %v81
  %v162 = vunpack.c.l.b16 %v82
  %v163 = vunpack.c.l.b16 %v83
  %v164 = vunpack.c.l.b16 %v84
  %v165 = vpack.c.b16 %v150, %v149
  %v166 = vpack.c.b16 %v152, %v151
  %v167 = vpack.c.b16 %v154, %v153
  %v168 = vpack.c.b16 %v156, %v155
  %v169 = vpack.c.b16 %v158, %v157
  %v170 = vpack.c.b16 %v160, %v159
  %v171 = vpack.c.b16 %v162, %v161
  %v172 = vpack.c.b16 %v164, %v163
  %181 = vmatprep.subr.bf16.mxu0 0
  %182 = vmatpush1.bf16.msra.mxu0 %v165
  %183 = vmatprep.subr.bf16.mxu0 0
  %184 = vmatpush1.bf16.msra.mxu0 %v166
  %185 = vmatprep.subr.bf16.mxu0 0
  %186 = vmatpush1.bf16.msra.mxu0 %v167
  %187 = vmatprep.subr.bf16.mxu0 0
  %188 = vmatpush1.bf16.msra.mxu0 %v168
  %189 = vmatprep.subr.bf16.mxu0 0
  %190 = vmatpush1.bf16.msra.mxu0 %v169
  %191 = vmatprep.subr.bf16.mxu0 0
  %192 = vmatpush1.bf16.msra.mxu0 %v170
  %193 = vmatprep.subr.bf16.mxu0 0
  %194 = vmatpush1.bf16.msra.mxu0 %v171
  %195 = vmatprep.subr.bf16.mxu0 0
  %196 = vmatpush1.bf16.msra.mxu0 %v172
  %197 = vmatprep.subr.bf16.mxu0 0
  %198 = vmatpush1.bf16.msra.mxu0 0
  %199 = vmatprep.subr.bf16.mxu0 0
  %200 = vmatpush1.bf16.msra.mxu0 0
  %201 = vmatprep.subr.bf16.mxu0 0
  %202 = vmatpush1.bf16.msra.mxu0 0
  %203 = vmatprep.subr.bf16.mxu0 0
  %204 = vmatpush1.bf16.msra.mxu0 0
  %205 = vmatprep.subr.bf16.mxu0 0
  %206 = vmatpush1.bf16.msra.mxu0 0
  %207 = vmatprep.subr.bf16.mxu0 0
  %208 = vmatpush1.bf16.msra.mxu0 0
  %209 = vmatprep.subr.bf16.mxu0 0
  %210 = vmatpush1.bf16.msra.mxu0 0
  %211 = vmatprep.subr.bf16.mxu0 0
  %212 = vmatpush1.bf16.msra.mxu0 0
  %213 = vmatprep.mubr.bf16.mxu0 0
  %214 = vmatmul.mubr.bf16.gmra.mrb[0].mxu0 %v117
  %v215 = vpop.f32.mrb[0].mxu0
  %v216 = vadd.f32 0.0, %v215
  %v217 = vpop.f32.mrb[0].mxu0
  %v218 = vpop.f32.mrb[0].mxu0
  %v219 = vadd.f32 0.0, %v218
  %v220 = vpop.f32.mrb[0].mxu0
  %221 = vmatprep.mubr.bf16.mxu0 0
  %222 = vmatmul.mubr.bf16.gmra.mrb[0].mxu0 %v118
  %v223 = vpop.f32.mrb[0].mxu0
  %v224 = vadd.f32 0.0, %v223
  %v225 = vpop.f32.mrb[0].mxu0
  %v226 = vpop.f32.mrb[0].mxu0
  %v227 = vadd.f32 0.0, %v226
  %v228 = vpop.f32.mrb[0].mxu0
  %229 = vmatprep.mubr.bf16.mxu0 0
  %230 = vmatmul.mubr.bf16.gmra.mrb[0].mxu0 %v119
  %v231 = vpop.f32.mrb[0].mxu0
  %v232 = vadd.f32 0.0, %v231
  %v233 = vpop.f32.mrb[0].mxu0
  %v234 = vpop.f32.mrb[0].mxu0
  %v235 = vadd.f32 0.0, %v234
  %v236 = vpop.f32.mrb[0].mxu0
  %237 = vmatprep.mubr.bf16.mxu0 0
  %238 = vmatmul.mubr.bf16.gmra.mrb[0].mxu0 %v120
  %v239 = vpop.f32.mrb[0].mxu0
  %v240 = vadd.f32 0.0, %v239
  %v241 = vpop.f32.mrb[0].mxu0
  %v242 = vpop.f32.mrb[0].mxu0
  %v243 = vadd.f32 0.0, %v242
  %v244 = vpop.f32.mrb[0].mxu0
  %245 = vmatprep.mubr.bf16.mxu0 0
  %246 = vmatmul.mubr.bf16.gmra.mrb[0].mxu0 %v121
  %v247 = vpop.f32.mrb[0].mxu0
  %v248 = vadd.f32 0.0, %v247
  %v249 = vpop.f32.mrb[0].mxu0
  %v250 = vpop.f32.mrb[0].mxu0
  %v251 = vadd.f32 0.0, %v250
  %v252 = vpop.f32.mrb[0].mxu0
  %253 = vmatprep.mubr.bf16.mxu0 0
  %254 = vmatmul.mubr.bf16.gmra.mrb[0].mxu0 %v122
  %v255 = vpop.f32.mrb[0].mxu0
  %v256 = vadd.f32 0.0, %v255
  %v257 = vpop.f32.mrb[0].mxu0
  %v258 = vpop.f32.mrb[0].mxu0
  %v259 = vadd.f32 0.0, %v258
  %v260 = vpop.f32.mrb[0].mxu0
  %261 = vmatprep.mubr.bf16.mxu0 0
  %262 = vmatmul.mubr.bf16.gmra.mrb[0].mxu0 %v123
  %v263 = vpop.f32.mrb[0].mxu0
  %v264 = vadd.f32 0.0, %v263
  %v265 = vpop.f32.mrb[0].mxu0
  %v266 = vpop.f32.mrb[0].mxu0
  %v267 = vadd.f32 0.0, %v266
  %v268 = vpop.f32.mrb[0].mxu0
  %269 = vmatprep.mubr.bf16.mxu0 0
  %270 = vmatmul.mubr.bf16.gmra.mrb[0].mxu0 %v124
  %v271 = vpop.f32.mrb[0].mxu0
  %v272 = vadd.f32 0.0, %v271
  %v273 = vpop.f32.mrb[0].mxu0
  %v274 = vpop.f32.mrb[0].mxu0
  %v275 = vadd.f32 0.0, %v274
  %v276 = vpop.f32.mrb[0].mxu0
  %277 = vdwg.mxu0
  %v294 = vunpack.c.l.b16 %v21
  %v295 = vunpack.c.l.b16 %v22
  %v296 = vunpack.c.l.b16 %v23
  %v297 = vunpack.c.l.b16 %v24
  %v298 = vunpack.c.l.b16 %v25
  %v299 = vunpack.c.l.b16 %v26
  %v300 = vunpack.c.l.b16 %v27
  %v301 = vunpack.c.l.b16 %v28
  %v302 = vunpack.c.l.b16 %v29
  %v303 = vunpack.c.l.b16 %v30
  %v304 = vunpack.c.l.b16 %v31
  %v305 = vunpack.c.l.b16 %v32
  %v306 = vunpack.c.l.b16 %v33
  %v307 = vunpack.c.l.b16 %v34
  %v308 = vunpack.c.l.b16 %v35
  %v309 = vunpack.c.l.b16 %v36
  %v310 = vpack.c.b16 %v295, %v294
  %v311 = vpack.c.b16 %v297, %v296
  %v312 = vpack.c.b16 %v299, %v298
  %v313 = vpack.c.b16 %v301, %v300
  %v314 = vpack.c.b16 %v303, %v302
  %v315 = vpack.c.b16 %v305, %v304
  %v316 = vpack.c.b16 %v307, %v306
  %v317 = vpack.c.b16 %v309, %v308
  %v342 = vunpack.c.l.b16 %v37
  %v343 = vunpack.c.l.b16 %v38
  %v344 = vunpack.c.l.b16 %v39
  %v345 = vunpack.c.l.b16 %v40
  %v346 = vunpack.c.l.b16 %v41
  %v347 = vunpack.c.l.b16 %v42
  %v348 = vunpack.c.l.b16 %v43
  %v349 = vunpack.c.l.b16 %v44
  %v350 = vunpack.c.l.b16 %v45
  %v351 = vunpack.c.l.b16 %v46
  %v352 = vunpack.c.l.b16 %v47
  %v353 = vunpack.c.l.b16 %v48
  %v354 = vunpack.c.l.b16 %v49
  %v355 = vunpack.c.l.b16 %v50
  %v356 = vunpack.c.l.b16 %v51
  %v357 = vunpack.c.l.b16 %v52
  %v358 = vpack.c.b16 %v343, %v342
  %v359 = vpack.c.b16 %v345, %v344
  %v360 = vpack.c.b16 %v347, %v346
  %v361 = vpack.c.b16 %v349, %v348
  %v362 = vpack.c.b16 %v351, %v350
  %v363 = vpack.c.b16 %v353, %v352
  %v364 = vpack.c.b16 %v355, %v354
  %v365 = vpack.c.b16 %v357, %v356
  %374 = vmatprep.subr.bf16.mxu0 0
  %375 = vmatpush1.bf16.msra.mxu0 %v358
  %376 = vmatprep.subr.bf16.mxu0 0
  %377 = vmatpush1.bf16.msra.mxu0 %v359
  %378 = vmatprep.subr.bf16.mxu0 0
  %379 = vmatpush1.bf16.msra.mxu0 %v360
  %380 = vmatprep.subr.bf16.mxu0 0
  %381 = vmatpush1.bf16.msra.mxu0 %v361
  %382 = vmatprep.subr.bf16.mxu0 0
  %383 = vmatpush1.bf16.msra.mxu0 %v362
  %384 = vmatprep.subr.bf16.mxu0 0
  %385 = vmatpush1.bf16.msra.mxu0 %v363
  %386 = vmatprep.subr.bf16.mxu0 0
  %387 = vmatpush1.bf16.msra.mxu0 %v364
  %388 = vmatprep.subr.bf16.mxu0 0
  %389 = vmatpush1.bf16.msra.mxu0 %v365
  %390 = vmatprep.subr.bf16.mxu0 0
  %391 = vmatpush1.bf16.msra.mxu0 0
  %392 = vmatprep.subr.bf16.mxu0 0
  %393 = vmatpush1.bf16.msra.mxu0 0
  %394 = vmatprep.subr.bf16.mxu0 0
  %395 = vmatpush1.bf16.msra.mxu0 0
  %396 = vmatprep.subr.bf16.mxu0 0
  %397 = vmatpush1.bf16.msra.mxu0 0
  %398 = vmatprep.subr.bf16.mxu0 0
  %399 = vmatpush1.bf16.msra.mxu0 0
  %400 = vmatprep.subr.bf16.mxu0 0
  %401 = vmatpush1.bf16.msra.mxu0 0
  %402 = vmatprep.subr.bf16.mxu0 0
  %403 = vmatpush1.bf16.msra.mxu0 0
  %404 = vmatprep.subr.bf16.mxu0 0
  %405 = vmatpush1.bf16.msra.mxu0 0
  %406 = vmatprep.mubr.bf16.mxu0 0
  %407 = vmatmul.mubr.bf16.gmra.mrb[0].mxu0 %v310
  %v408 = vpop.f32.mrb[0].mxu0
  %v409 = vadd.f32 %v216, %v408
  %v410 = vpop.f32.mrb[0].mxu0
  %v411 = vpop.f32.mrb[0].mxu0
  %v412 = vadd.f32 %v219, %v411
  %v413 = vpop.f32.mrb[0].mxu0
  %414 = vmatprep.mubr.bf16.mxu0 0
  %415 = vmatmul.mubr.bf16.gmra.mrb[0].mxu0 %v311
  %v416 = vpop.f32.mrb[0].mxu0
  %v417 = vadd.f32 %v224, %v416
  %v418 = vpop.f32.mrb[0].mxu0
  %v419 = vpop.f32.mrb[0].mxu0
  %v420 = vadd.f32 %v227, %v419
  %v421 = vpop.f32.mrb[0].mxu0
  %422 = vmatprep.mubr.bf16.mxu0 0
  %423 = vmatmul.mubr.bf16.gmra.mrb[0].mxu0 %v312
  %v424 = vpop.f32.mrb[0].mxu0
  %v425 = vadd.f32 %v232, %v424
  %v426 = vpop.f32.mrb[0].mxu0
  %v427 = vpop.f32.mrb[0].mxu0
  %v428 = vadd.f32 %v235, %v427
  %v429 = vpop.f32.mrb[0].mxu0
  %430 = vmatprep.mubr.bf16.mxu0 0
  %431 = vmatmul.mubr.bf16.gmra.mrb[0].mxu0 %v313
  %v432 = vpop.f32.mrb[0].mxu0
  %v433 = vadd.f32 %v240, %v432
  %v434 = vpop.f32.mrb[0].mxu0
  %v435 = vpop.f32.mrb[0].mxu0
  %v436 = vadd.f32 %v243, %v435
  %v437 = vpop.f32.mrb[0].mxu0
  %438 = vmatprep.mubr.bf16.mxu0 0
  %439 = vmatmul.mubr.bf16.gmra.mrb[0].mxu0 %v314
  %v440 = vpop.f32.mrb[0].mxu0
  %v441 = vadd.f32 %v248, %v440
  %v442 = vpop.f32.mrb[0].mxu0
  %v443 = vpop.f32.mrb[0].mxu0
  %v444 = vadd.f32 %v251, %v443
  %v445 = vpop.f32.mrb[0].mxu0
  %446 = vmatprep.mubr.bf16.mxu0 0
  %447 = vmatmul.mubr.bf16.gmra.mrb[0].mxu0 %v315
  %v448 = vpop.f32.mrb[0].mxu0
  %v449 = vadd.f32 %v256, %v448
  %v450 = vpop.f32.mrb[0].mxu0
  %v451 = vpop.f32.mrb[0].mxu0
  %v452 = vadd.f32 %v259, %v451
  %v453 = vpop.f32.mrb[0].mxu0
  %454 = vmatprep.mubr.bf16.mxu0 0
  %455 = vmatmul.mubr.bf16.gmra.mrb[0].mxu0 %v316
  %v456 = vpop.f32.mrb[0].mxu0
  %v457 = vadd.f32 %v264, %v456
  %v458 = vpop.f32.mrb[0].mxu0
  %v459 = vpop.f32.mrb[0].mxu0
  %v460 = vadd.f32 %v267, %v459
  %v461 = vpop.f32.mrb[0].mxu0
  %462 = vmatprep.mubr.bf16.mxu0 0
  %463 = vmatmul.mubr.bf16.gmra.mrb[0].mxu0 %v317
  %v464 = vpop.f32.mrb[0].mxu0
  %v465 = vadd.f32 %v272, %v464
  %v466 = vpop.f32.mrb[0].mxu0
  %v467 = vpop.f32.mrb[0].mxu0
  %v468 = vadd.f32 %v275, %v467
  %v469 = vpop.f32.mrb[0].mxu0
  %470 = vdwg.mxu0
  %v471 = vld [vmem:[%s4] sm:$0x1]
  %v473 = vlaneseq
  %v474 = vshrl.u32 %v473, 7
  %v475 = vsub.s32 0, %v474
  %v476 = vrot.slane %v471, %v475
  %v478 = vadd.f32 %v409, %v476
  %v479 = vadd.f32 %v412, %v476
  %v480 = vadd.f32 %v417, %v476
  %v481 = vadd.f32 %v420, %v476
  %v482 = vadd.f32 %v425, %v476
  %v483 = vadd.f32 %v428, %v476
  %v484 = vadd.f32 %v433, %v476
  %v485 = vadd.f32 %v436, %v476
  %v486 = vadd.f32 %v441, %v476
  %v487 = vadd.f32 %v444, %v476
  %v488 = vadd.f32 %v449, %v476
  %v489 = vadd.f32 %v452, %v476
  %v490 = vadd.f32 %v457, %v476
  %v491 = vadd.f32 %v460, %v476
  %v492 = vadd.f32 %v465, %v476
  %v493 = vadd.f32 %v468, %v476
  %494 = vst [vmem:[%s5] sm:$0xff] %v478
  %495 = vst [vmem:[%s5 + $0x8] sm:$0xff] %v479
  %496 = vst [vmem:[%s5 + $0x10] sm:$0xff] %v480
  %497 = vst [vmem:[%s5 + $0x18] sm:$0xff] %v481
  %498 = vst [vmem:[%s5 + $0x20] sm:$0xff] %v482
  %499 = vst [vmem:[%s5 + $0x28] sm:$0xff] %v483
  %500 = vst [vmem:[%s5 + $0x30] sm:$0xff] %v484
  %501 = vst [vmem:[%s5 + $0x38] sm:$0xff] %v485
  %502 = vst [vmem:[%s5 + $0x40] sm:$0xff] %v486
  %503 = vst [vmem:[%s5 + $0x48] sm:$0xff] %v487
  %504 = vst [vmem:[%s5 + $0x50] sm:$0xff] %v488
  %505 = vst [vmem:[%s5 + $0x58] sm:$0xff] %v489
  %506 = vst [vmem:[%s5 + $0x60] sm:$0xff] %v490
  %507 = vst [vmem:[%s5 + $0x68] sm:$0xff] %v491
  %508 = vst [vmem:[%s5 + $0x70] sm:$0xff] %v492
  %509 = vst [vmem:[%s5 + $0x78] sm:$0xff] %v493
  // Predicated region
  $region22: #{gnn_forward.5} parent=0 // pred_check
    _
  $region23: #{gnn_forward.5} parent=0 // pred_check_branch
    %511 = sbr.rel (0) target = $region25
  $region24: #{gnn_forward.5} parent=0 // pred_region
    _
  $region25: #{gnn_forward.5} parent=0 // pred_fallthru
    _
  // Predicated region
  $region26: #{gnn_forward.5} parent=0 // pred_check
    _
  $region27: #{gnn_forward.5} parent=0 // pred_check_branch
    %513 = sbr.rel (0) target = $region29
  $region28: #{gnn_forward.5} parent=0 // pred_region
    _
  $region29: #{gnn_forward.5} parent=0 // pred_fallthru
    _

// kernel: gnn_forward.4
$region0: #{gnn_forward.4}
  #allocation0 [shape = 'u32[]', space=smem, size = 0x4, offset = 0x4, fixed_abs, tag = 'smem constant byte address 0x4 - core index']
  #allocation1 [shape = 'u32[144,128]{1,0:T(1,128)}', space=vmem, size = 0x12000, scoped, tag = 'internal scratch']
  #allocation2 [shape = 'f32[128,256]{1,0:T(8,128)}', space=vmem, size = 0x20000, scoped, tag = 'scratch operand']
  %s0 = inlined_call_operand.vmem [shape: bf16[128,128], index: 0, kind: input, shape index: {}]
  %s1 = inlined_call_operand.vmem [shape: bf16[128,128], index: 1, kind: input, shape index: {}, may-alias: {1,2}]
  %s2 = inlined_call_operand.vmem [shape: bf16[128,128], index: 2, kind: input, shape index: {}, may-alias: {1,2}]
  %s3 = inlined_call_operand.vmem [shape: bf16[256,128], index: 3, kind: input, shape index: {}]
  %s4 = inlined_call_operand.vmem [shape: f32[1,128], index: 4, kind: input, shape index: {}]
  %s5 = inlined_call_operand.vmem [shape: bf16[128,128], index: 5, kind: output, shape index: {}]
  %s6 = sld [smem:[#allocation0]]
  $region38: #{gnn_forward.4} parent=0
    _
  %s8 = ssub.s32 1, %s6
  %s9 = scalar_select 0, %s8, %s6
  // Predicated region
  $region2: #{gnn_forward.4} parent=0 // pred_check
    _
  $region3: #{gnn_forward.4} parent=0 // pred_check_branch
    %11 = sbr.rel (0) target = $region5
  $region4: #{gnn_forward.4} parent=0 // pred_region
    _
  $region5: #{gnn_forward.4} parent=0 // pred_fallthru
    _
  // Predicated region
  $region6: #{gnn_forward.4} parent=0 // pred_check
    _
  $region7: #{gnn_forward.4} parent=0 // pred_check_branch
    %13 = sbr.rel (0) target = $region9
  $region8: #{gnn_forward.4} parent=0 // pred_region
    _
  $region9: #{gnn_forward.4} parent=0 // pred_fallthru
    _
  // Predicated region
  $region10: #{gnn_forward.4} parent=0 // pred_check
    _
  $region11: #{gnn_forward.4} parent=0 // pred_check_branch
    %15 = sbr.rel (0) target = $region13
  $region12: #{gnn_forward.4} parent=0 // pred_region
    _
  $region13: #{gnn_forward.4} parent=0 // pred_fallthru
    _
  // Predicated region
  $region14: #{gnn_forward.4} parent=0 // pred_check
    _
  $region15: #{gnn_forward.4} parent=0 // pred_check_branch
    %17 = sbr.rel (0) target = $region17
  $region16: #{gnn_forward.4} parent=0 // pred_region
    _
  $region17: #{gnn_forward.4} parent=0 // pred_fallthru
    _
  // Predicated region
  $region18: #{gnn_forward.4} parent=0 // pred_check
    _
  $region19: #{gnn_forward.4} parent=0 // pred_check_branch
    %19 = sbr.rel (0) target = $region21
  $region20: #{gnn_forward.4} parent=0 // pred_region
    _
  $region21: #{gnn_forward.4} parent=0 // pred_fallthru
    _
  %p21 = scmp.eq.s32.totalorder 0, 0
  // Predicated region
  $region22: #{gnn_forward.4} parent=0 // pred_check
    %p22 = pneg %p21
  $region23: #{gnn_forward.4} parent=0 // pred_check_branch
    %24 = sbr.rel (%p22) target = $region25
  $region24: #{gnn_forward.4} parent=0 // pred_region
    %25 = vst [vmem:[#allocation2] sm:$0xff] 0.0
    %26 = vst [vmem:[#allocation2 + $0x10] sm:$0xff] 0.0
    %27 = vst [vmem:[#allocation2 + $0x20] sm:$0xff] 0.0
    %28 = vst [vmem:[#allocation2 + $0x30] sm:$0xff] 0.0
    %29 = vst [vmem:[#allocation2 + $0x40] sm:$0xff] 0.0
    %30 = vst [vmem:[#allocation2 + $0x50] sm:$0xff] 0.0
    %31 = vst [vmem:[#allocation2 + $0x60] sm:$0xff] 0.0
    %32 = vst [vmem:[#allocation2 + $0x70] sm:$0xff] 0.0
    %33 = vst [vmem:[#allocation2 + $0x80] sm:$0xff] 0.0
    %34 = vst [vmem:[#allocation2 + $0x90] sm:$0xff] 0.0
    %35 = vst [vmem:[#allocation2 + $0xa0] sm:$0xff] 0.0
    %36 = vst [vmem:[#allocation2 + $0xb0] sm:$0xff] 0.0
    %37 = vst [vmem:[#allocation2 + $0xc0] sm:$0xff] 0.0
    %38 = vst [vmem:[#allocation2 + $0xd0] sm:$0xff] 0.0
    %39 = vst [vmem:[#allocation2 + $0xe0] sm:$0xff] 0.0
    %40 = vst [vmem:[#allocation2 + $0xf0] sm:$0xff] 0.0
    %v41 = vld [vmem:[%s2] sm:$0xf]
    %v42 = vld [vmem:[%s2 + $0x4] sm:$0xf]
    %v43 = vld [vmem:[%s2 + $0x8] sm:$0xf]
    %v44 = vld [vmem:[%s2 + $0xc] sm:$0xf]
    %v45 = vld [vmem:[%s2 + $0x10] sm:$0xf]
    %v46 = vld [vmem:[%s2 + $0x14] sm:$0xf]
    %v47 = vld [vmem:[%s2 + $0x18] sm:$0xf]
    %v48 = vld [vmem:[%s2 + $0x1c] sm:$0xf]
    %v49 = vld [vmem:[%s2 + $0x20] sm:$0xf]
    %v50 = vld [vmem:[%s2 + $0x24] sm:$0xf]
    %v51 = vld [vmem:[%s2 + $0x28] sm:$0xf]
    %v52 = vld [vmem:[%s2 + $0x2c] sm:$0xf]
    %v53 = vld [vmem:[%s2 + $0x30] sm:$0xf]
    %v54 = vld [vmem:[%s2 + $0x34] sm:$0xf]
    %v55 = vld [vmem:[%s2 + $0x38] sm:$0xf]
    %v56 = vld [vmem:[%s2 + $0x3c] sm:$0xf]
    %v57 = vunpack.c.l.bf16 %v41
    %v58 = vunpack.c.l.bf16 %v42
    %v59 = vunpack.c.l.bf16 %v43
    %v60 = vunpack.c.l.bf16 %v44
    %v61 = vunpack.c.l.bf16 %v45
    %v62 = vunpack.c.l.bf16 %v46
    %v63 = vunpack.c.l.bf16 %v47
    %v64 = vunpack.c.l.bf16 %v48
    %v65 = vunpack.c.l.bf16 %v49
    %v66 = vunpack.c.l.bf16 %v50
    %v67 = vunpack.c.l.bf16 %v51
    %v68 = vunpack.c.l.bf16 %v52
    %v69 = vunpack.c.l.bf16 %v53
    %v70 = vunpack.c.l.bf16 %v54
    %v71 = vunpack.c.l.bf16 %v55
    %v72 = vunpack.c.l.bf16 %v56
    %73 = vst [vmem:[#allocation2 + $0x8] sm:$0xff] %v57
    %74 = vst [vmem:[#allocation2 + $0x18] sm:$0xff] %v58
    %75 = vst [vmem:[#allocation2 + $0x28] sm:$0xff] %v59
    %76 = vst [vmem:[#allocation2 + $0x38] sm:$0xff] %v60
    %77 = vst [vmem:[#allocation2 + $0x48] sm:$0xff] %v61
    %78 = vst [vmem:[#allocation2 + $0x58] sm:$0xff] %v62
    %79 = vst [vmem:[#allocation2 + $0x68] sm:$0xff] %v63
    %80 = vst [vmem:[#allocation2 + $0x78] sm:$0xff] %v64
    %81 = vst [vmem:[#allocation2 + $0x88] sm:$0xff] %v65
    %82 = vst [vmem:[#allocation2 + $0x98] sm:$0xff] %v66
    %83 = vst [vmem:[#allocation2 + $0xa8] sm:$0xff] %v67
    %84 = vst [vmem:[#allocation2 + $0xb8] sm:$0xff] %v68
    %85 = vst [vmem:[#allocation2 + $0xc8] sm:$0xff] %v69
    %86 = vst [vmem:[#allocation2 + $0xd8] sm:$0xff] %v70
    %87 = vst [vmem:[#allocation2 + $0xe8] sm:$0xff] %v71
    %88 = vst [vmem:[#allocation2 + $0xf8] sm:$0xff] %v72
  $region25: #{gnn_forward.4} parent=0 // pred_fallthru
    _
  %v89 = vld [vmem:[#allocation2] sm:$0xff]
  %v90 = vld [vmem:[#allocation2 + $0x10] sm:$0xff]
  %v91 = vld [vmem:[#allocation2 + $0x20] sm:$0xff]
  %v92 = vld [vmem:[#allocation2 + $0x30] sm:$0xff]
  %v93 = vld [vmem:[#allocation2 + $0x40] sm:$0xff]
  %v94 = vld [vmem:[#allocation2 + $0x50] sm:$0xff]
  %v95 = vld [vmem:[#allocation2 + $0x60] sm:$0xff]
  %v96 = vld [vmem:[#allocation2 + $0x70] sm:$0xff]
  %v97 = vld [vmem:[#allocation2 + $0x80] sm:$0xff]
  %v98 = vld [vmem:[#allocation2 + $0x90] sm:$0xff]
  %v99 = vld [vmem:[#allocation2 + $0xa0] sm:$0xff]
  %v100 = vld [vmem:[#allocation2 + $0xb0] sm:$0xff]
  %v101 = vld [vmem:[#allocation2 + $0xc0] sm:$0xff]
  %v102 = vld [vmem:[#allocation2 + $0xd0] sm:$0xff]
  %v103 = vld [vmem:[#allocation2 + $0xe0] sm:$0xff]
  %v104 = vld [vmem:[#allocation2 + $0xf0] sm:$0xff]
  %v105 = vld [vmem:[%s0] sm:$0xf]
  %v106 = vld [vmem:[%s0 + $0x4] sm:$0xf]
  %v107 = vld [vmem:[%s0 + $0x8] sm:$0xf]
  %v108 = vld [vmem:[%s0 + $0xc] sm:$0xf]
  %v109 = vld [vmem:[%s0 + $0x10] sm:$0xf]
  %v110 = vld [vmem:[%s0 + $0x14] sm:$0xf]
  %v111 = vld [vmem:[%s0 + $0x18] sm:$0xf]
  %v112 = vld [vmem:[%s0 + $0x1c] sm:$0xf]
  %v113 = vld [vmem:[%s0 + $0x20] sm:$0xf]
  %v114 = vld [vmem:[%s0 + $0x24] sm:$0xf]
  %v115 = vld [vmem:[%s0 + $0x28] sm:$0xf]
  %v116 = vld [vmem:[%s0 + $0x2c] sm:$0xf]
  %v117 = vld [vmem:[%s0 + $0x30] sm:$0xf]
  %v118 = vld [vmem:[%s0 + $0x34] sm:$0xf]
  %v119 = vld [vmem:[%s0 + $0x38] sm:$0xf]
  %v120 = vld [vmem:[%s0 + $0x3c] sm:$0xf]
  %v121 = vld [vmem:[%s1] sm:$0xf]
  %v122 = vld [vmem:[%s1 + $0x4] sm:$0xf]
  %v123 = vld [vmem:[%s1 + $0x8] sm:$0xf]
  %v124 = vld [vmem:[%s1 + $0xc] sm:$0xf]
  %v125 = vld [vmem:[%s1 + $0x10] sm:$0xf]
  %v126 = vld [vmem:[%s1 + $0x14] sm:$0xf]
  %v127 = vld [vmem:[%s1 + $0x18] sm:$0xf]
  %v128 = vld [vmem:[%s1 + $0x1c] sm:$0xf]
  %v129 = vld [vmem:[%s1 + $0x20] sm:$0xf]
  %v130 = vld [vmem:[%s1 + $0x24] sm:$0xf]
  %v131 = vld [vmem:[%s1 + $0x28] sm:$0xf]
  %v132 = vld [vmem:[%s1 + $0x2c] sm:$0xf]
  %v133 = vld [vmem:[%s1 + $0x30] sm:$0xf]
  %v134 = vld [vmem:[%s1 + $0x34] sm:$0xf]
  %v135 = vld [vmem:[%s1 + $0x38] sm:$0xf]
  %v136 = vld [vmem:[%s1 + $0x3c] sm:$0xf]
  %v153 = vunpack.c.l.b16 %v105
  %v154 = vunpack.c.l.b16 %v106
  %v155 = vunpack.c.l.b16 %v107
  %v156 = vunpack.c.l.b16 %v108
  %v157 = vunpack.c.l.b16 %v109
  %v158 = vunpack.c.l.b16 %v110
  %v159 = vunpack.c.l.b16 %v111
  %v160 = vunpack.c.l.b16 %v112
  %v161 = vunpack.c.l.b16 %v113
  %v162 = vunpack.c.l.b16 %v114
  %v163 = vunpack.c.l.b16 %v115
  %v164 = vunpack.c.l.b16 %v116
  %v165 = vunpack.c.l.b16 %v117
  %v166 = vunpack.c.l.b16 %v118
  %v167 = vunpack.c.l.b16 %v119
  %v168 = vunpack.c.l.b16 %v120
  %v169 = vpack.c.b16 %v154, %v153
  %v170 = vpack.c.b16 %v156, %v155
  %v171 = vpack.c.b16 %v158, %v157
  %v172 = vpack.c.b16 %v160, %v159
  %v173 = vpack.c.b16 %v162, %v161
  %v174 = vpack.c.b16 %v164, %v163
  %v175 = vpack.c.b16 %v166, %v165
  %v176 = vpack.c.b16 %v168, %v167
  %v201 = vunpack.c.l.b16 %v121
  %v202 = vunpack.c.l.b16 %v122
  %v203 = vunpack.c.l.b16 %v123
  %v204 = vunpack.c.l.b16 %v124
  %v205 = vunpack.c.l.b16 %v125
  %v206 = vunpack.c.l.b16 %v126
  %v207 = vunpack.c.l.b16 %v127
  %v208 = vunpack.c.l.b16 %v128
  %v209 = vunpack.c.l.b16 %v129
  %v210 = vunpack.c.l.b16 %v130
  %v211 = vunpack.c.l.b16 %v131
  %v212 = vunpack.c.l.b16 %v132
  %v213 = vunpack.c.l.b16 %v133
  %v214 = vunpack.c.l.b16 %v134
  %v215 = vunpack.c.l.b16 %v135
  %v216 = vunpack.c.l.b16 %v136
  %v217 = vpack.c.b16 %v202, %v201
  %v218 = vpack.c.b16 %v204, %v203
  %v219 = vpack.c.b16 %v206, %v205
  %v220 = vpack.c.b16 %v208, %v207
  %v221 = vpack.c.b16 %v210, %v209
  %v222 = vpack.c.b16 %v212, %v211
  %v223 = vpack.c.b16 %v214, %v213
  %v224 = vpack.c.b16 %v216, %v215
  %233 = vmatprep.subr.bf16.mxu0 0
  %234 = vmatpush1.bf16.msra.mxu0 %v217
  %235 = vmatprep.subr.bf16.mxu0 0
  %236 = vmatpush1.bf16.msra.mxu0 %v218
  %237 = vmatprep.subr.bf16.mxu0 0
  %238 = vmatpush1.bf16.msra.mxu0 %v219
  %239 = vmatprep.subr.bf16.mxu0 0
  %240 = vmatpush1.bf16.msra.mxu0 %v220
  %241 = vmatprep.subr.bf16.mxu0 0
  %242 = vmatpush1.bf16.msra.mxu0 %v221
  %243 = vmatprep.subr.bf16.mxu0 0
  %244 = vmatpush1.bf16.msra.mxu0 %v222
  %245 = vmatprep.subr.bf16.mxu0 0
  %246 = vmatpush1.bf16.msra.mxu0 %v223
  %247 = vmatprep.subr.bf16.mxu0 0
  %248 = vmatpush1.bf16.msra.mxu0 %v224
  %249 = vmatprep.subr.bf16.mxu0 0
  %250 = vmatpush1.bf16.msra.mxu0 0
  %251 = vmatprep.subr.bf16.mxu0 0
  %252 = vmatpush1.bf16.msra.mxu0 0
  %253 = vmatprep.subr.bf16.mxu0 0
  %254 = vmatpush1.bf16.msra.mxu0 0
  %255 = vmatprep.subr.bf16.mxu0 0
  %256 = vmatpush1.bf16.msra.mxu0 0
  %257 = vmatprep.subr.bf16.mxu0 0
  %258 = vmatpush1.bf16.msra.mxu0 0
  %259 = vmatprep.subr.bf16.mxu0 0
  %260 = vmatpush1.bf16.msra.mxu0 0
  %261 = vmatprep.subr.bf16.mxu0 0
  %262 = vmatpush1.bf16.msra.mxu0 0
  %263 = vmatprep.subr.bf16.mxu0 0
  %264 = vmatpush1.bf16.msra.mxu0 0
  %265 = vmatprep.mubr.bf16.mxu0 0
  %266 = vmatmul.mubr.bf16.gmra.mrb[0].mxu0 %v169
  %v267 = vpop.f32.mrb[0].mxu0
  %v268 = vadd.f32 0.0, %v267
  %v269 = vpop.f32.mrb[0].mxu0
  %v270 = vpop.f32.mrb[0].mxu0
  %v271 = vadd.f32 0.0, %v270
  %v272 = vpop.f32.mrb[0].mxu0
  %273 = vmatprep.mubr.bf16.mxu0 0
  %274 = vmatmul.mubr.bf16.gmra.mrb[0].mxu0 %v170
  %v275 = vpop.f32.mrb[0].mxu0
  %v276 = vadd.f32 0.0, %v275
  %v277 = vpop.f32.mrb[0].mxu0
  %v278 = vpop.f32.mrb[0].mxu0
  %v279 = vadd.f32 0.0, %v278
  %v280 = vpop.f32.mrb[0].mxu0
  %281 = vmatprep.mubr.bf16.mxu0 0
  %282 = vmatmul.mubr.bf16.gmra.mrb[0].mxu0 %v171
  %v283 = vpop.f32.mrb[0].mxu0
  %v284 = vadd.f32 0.0, %v283
  %v285 = vpop.f32.mrb[0].mxu0
  %v286 = vpop.f32.mrb[0].mxu0
  %v287 = vadd.f32 0.0, %v286
  %v288 = vpop.f32.mrb[0].mxu0
  %289 = vmatprep.mubr.bf16.mxu0 0
  %290 = vmatmul.mubr.bf16.gmra.mrb[0].mxu0 %v172
  %v291 = vpop.f32.mrb[0].mxu0
  %v292 = vadd.f32 0.0, %v291
  %v293 = vpop.f32.mrb[0].mxu0
  %v294 = vpop.f32.mrb[0].mxu0
  %v295 = vadd.f32 0.0, %v294
  %v296 = vpop.f32.mrb[0].mxu0
  %297 = vmatprep.mubr.bf16.mxu0 0
  %298 = vmatmul.mubr.bf16.gmra.mrb[0].mxu0 %v173
  %v299 = vpop.f32.mrb[0].mxu0
  %v300 = vadd.f32 0.0, %v299
  %v301 = vpop.f32.mrb[0].mxu0
  %v302 = vpop.f32.mrb[0].mxu0
  %v303 = vadd.f32 0.0, %v302
  %v304 = vpop.f32.mrb[0].mxu0
  %305 = vmatprep.mubr.bf16.mxu0 0
  %306 = vmatmul.mubr.bf16.gmra.mrb[0].mxu0 %v174
  %v307 = vpop.f32.mrb[0].mxu0
  %v308 = vadd.f32 0.0, %v307
  %v309 = vpop.f32.mrb[0].mxu0
  %v310 = vpop.f32.mrb[0].mxu0
  %v311 = vadd.f32 0.0, %v310
  %v312 = vpop.f32.mrb[0].mxu0
  %313 = vmatprep.mubr.bf16.mxu0 0
  %314 = vmatmul.mubr.bf16.gmra.mrb[0].mxu0 %v175
  %v315 = vpop.f32.mrb[0].mxu0
  %v316 = vadd.f32 0.0, %v315
  %v317 = vpop.f32.mrb[0].mxu0
  %v318 = vpop.f32.mrb[0].mxu0
  %v319 = vadd.f32 0.0, %v318
  %v320 = vpop.f32.mrb[0].mxu0
  %321 = vmatprep.mubr.bf16.mxu0 0
  %322 = vmatmul.mubr.bf16.gmra.mrb[0].mxu0 %v176
  %v323 = vpop.f32.mrb[0].mxu0
  %v324 = vadd.f32 0.0, %v323
  %v325 = vpop.f32.mrb[0].mxu0
  %v326 = vpop.f32.mrb[0].mxu0
  %v327 = vadd.f32 0.0, %v326
  %v328 = vpop.f32.mrb[0].mxu0
  %329 = vdwg.mxu0
  %v330 = vadd.f32 %v89, %v268
  %v331 = vadd.f32 %v90, %v271
  %v332 = vadd.f32 %v91, %v276
  %v333 = vadd.f32 %v92, %v279
  %v334 = vadd.f32 %v93, %v284
  %v335 = vadd.f32 %v94, %v287
  %v336 = vadd.f32 %v95, %v292
  %v337 = vadd.f32 %v96, %v295
  %v338 = vadd.f32 %v97, %v300
  %v339 = vadd.f32 %v98, %v303
  %v340 = vadd.f32 %v99, %v308
  %v341 = vadd.f32 %v100, %v311
  %v342 = vadd.f32 %v101, %v316
  %v343 = vadd.f32 %v102, %v319
  %v344 = vadd.f32 %v103, %v324
  %v345 = vadd.f32 %v104, %v327
  %346 = vst [vmem:[#allocation2] sm:$0xff] %v330
  %347 = vst [vmem:[#allocation2 + $0x10] sm:$0xff] %v331
  %348 = vst [vmem:[#allocation2 + $0x20] sm:$0xff] %v332
  %349 = vst [vmem:[#allocation2 + $0x30] sm:$0xff] %v333
  %350 = vst [vmem:[#allocation2 + $0x40] sm:$0xff] %v334
  %351 = vst [vmem:[#allocation2 + $0x50] sm:$0xff] %v335
  %352 = vst [vmem:[#allocation2 + $0x60] sm:$0xff] %v336
  %353 = vst [vmem:[#allocation2 + $0x70] sm:$0xff] %v337
  %354 = vst [vmem:[#allocation2 + $0x80] sm:$0xff] %v338
  %355 = vst [vmem:[#allocation2 + $0x90] sm:$0xff] %v339
  %356 = vst [vmem:[#allocation2 + $0xa0] sm:$0xff] %v340
  %357 = vst [vmem:[#allocation2 + $0xb0] sm:$0xff] %v341
  %358 = vst [vmem:[#allocation2 + $0xc0] sm:$0xff] %v342
  %359 = vst [vmem:[#allocation2 + $0xd0] sm:$0xff] %v343
  %360 = vst [vmem:[#allocation2 + $0xe0] sm:$0xff] %v344
  %361 = vst [vmem:[#allocation2 + $0xf0] sm:$0xff] %v345
  // Predicated region
  $region26: #{gnn_forward.4} parent=0 // pred_check
    %p362 = pneg %p21
  $region27: #{gnn_forward.4} parent=0 // pred_check_branch
    %364 = sbr.rel (%p362) target = $region29
  $region28: #{gnn_forward.4} parent=0 // pred_region
    %v365 = vld [vmem:[#allocation2] sm:$0xff]
    %v366 = vld [vmem:[#allocation2 + $0x8] sm:$0xff]
    %v367 = vld [vmem:[#allocation2 + $0x10] sm:$0xff]
    %v368 = vld [vmem:[#allocation2 + $0x18] sm:$0xff]
    %v369 = vld [vmem:[#allocation2 + $0x20] sm:$0xff]
    %v370 = vld [vmem:[#allocation2 + $0x28] sm:$0xff]
    %v371 = vld [vmem:[#allocation2 + $0x30] sm:$0xff]
    %v372 = vld [vmem:[#allocation2 + $0x38] sm:$0xff]
    %v373 = vld [vmem:[#allocation2 + $0x40] sm:$0xff]
    %v374 = vld [vmem:[#allocation2 + $0x48] sm:$0xff]
    %v375 = vld [vmem:[#allocation2 + $0x50] sm:$0xff]
    %v376 = vld [vmem:[#allocation2 + $0x58] sm:$0xff]
    %v377 = vld [vmem:[#allocation2 + $0x60] sm:$0xff]
    %v378 = vld [vmem:[#allocation2 + $0x68] sm:$0xff]
    %v379 = vld [vmem:[#allocation2 + $0x70] sm:$0xff]
    %v380 = vld [vmem:[#allocation2 + $0x78] sm:$0xff]
    %v381 = vld [vmem:[#allocation2 + $0x80] sm:$0xff]
    %v382 = vld [vmem:[#allocation2 + $0x88] sm:$0xff]
    %v383 = vld [vmem:[#allocation2 + $0x90] sm:$0xff]
    %v384 = vld [vmem:[#allocation2 + $0x98] sm:$0xff]
    %v385 = vld [vmem:[#allocation2 + $0xa0] sm:$0xff]
    %v386 = vld [vmem:[#allocation2 + $0xa8] sm:$0xff]
    %v387 = vld [vmem:[#allocation2 + $0xb0] sm:$0xff]
    %v388 = vld [vmem:[#allocation2 + $0xb8] sm:$0xff]
    %v389 = vld [vmem:[#allocation2 + $0xc0] sm:$0xff]
    %v390 = vld [vmem:[#allocation2 + $0xc8] sm:$0xff]
    %v391 = vld [vmem:[#allocation2 + $0xd0] sm:$0xff]
    %v392 = vld [vmem:[#allocation2 + $0xd8] sm:$0xff]
    %v393 = vld [vmem:[#allocation2 + $0xe0] sm:$0xff]
    %v394 = vld [vmem:[#allocation2 + $0xe8] sm:$0xff]
    %v395 = vld [vmem:[#allocation2 + $0xf0] sm:$0xff]
    %v396 = vld [vmem:[#allocation2 + $0xf8] sm:$0xff]
    %v397 = vpack.c.bf16 %v367, %v365
    %v398 = vpack.c.bf16 %v368, %v366
    %v399 = vpack.c.bf16 %v371, %v369
    %v400 = vpack.c.bf16 %v372, %v370
    %v401 = vpack.c.bf16 %v375, %v373
    %v402 = vpack.c.bf16 %v376, %v374
    %v403 = vpack.c.bf16 %v379, %v377
    %v404 = vpack.c.bf16 %v380, %v378
    %v405 = vpack.c.bf16 %v383, %v381
    %v406 = vpack.c.bf16 %v384, %v382
    %v407 = vpack.c.bf16 %v387, %v385
    %v408 = vpack.c.bf16 %v388, %v386
    %v409 = vpack.c.bf16 %v391, %v389
    %v410 = vpack.c.bf16 %v392, %v390
    %v411 = vpack.c.bf16 %v395, %v393
    %v412 = vpack.c.bf16 %v396, %v394
    %v413 = vld [vmem:[%s3] sm:$0xf]
    %v414 = vld [vmem:[%s3 + $0x4] sm:$0xf]
    %v415 = vld [vmem:[%s3 + $0x8] sm:$0xf]
    %v416 = vld [vmem:[%s3 + $0xc] sm:$0xf]
    %v417 = vld [vmem:[%s3 + $0x10] sm:$0xf]
    %v418 = vld [vmem:[%s3 + $0x14] sm:$0xf]
    %v419 = vld [vmem:[%s3 + $0x18] sm:$0xf]
    %v420 = vld [vmem:[%s3 + $0x1c] sm:$0xf]
    %v421 = vld [vmem:[%s3 + $0x20] sm:$0xf]
    %v422 = vld [vmem:[%s3 + $0x24] sm:$0xf]
    %v423 = vld [vmem:[%s3 + $0x28] sm:$0xf]
    %v424 = vld [vmem:[%s3 + $0x2c] sm:$0xf]
    %v425 = vld [vmem:[%s3 + $0x30] sm:$0xf]
    %v426 = vld [vmem:[%s3 + $0x34] sm:$0xf]
    %v427 = vld [vmem:[%s3 + $0x38] sm:$0xf]
    %v428 = vld [vmem:[%s3 + $0x3c] sm:$0xf]
    %v429 = vld [vmem:[%s3 + $0x40] sm:$0xf]
    %v430 = vld [vmem:[%s3 + $0x44] sm:$0xf]
    %v431 = vld [vmem:[%s3 + $0x48] sm:$0xf]
    %v432 = vld [vmem:[%s3 + $0x4c] sm:$0xf]
    %v433 = vld [vmem:[%s3 + $0x50] sm:$0xf]
    %v434 = vld [vmem:[%s3 + $0x54] sm:$0xf]
    %v435 = vld [vmem:[%s3 + $0x58] sm:$0xf]
    %v436 = vld [vmem:[%s3 + $0x5c] sm:$0xf]
    %v437 = vld [vmem:[%s3 + $0x60] sm:$0xf]
    %v438 = vld [vmem:[%s3 + $0x64] sm:$0xf]
    %v439 = vld [vmem:[%s3 + $0x68] sm:$0xf]
    %v440 = vld [vmem:[%s3 + $0x6c] sm:$0xf]
    %v441 = vld [vmem:[%s3 + $0x70] sm:$0xf]
    %v442 = vld [vmem:[%s3 + $0x74] sm:$0xf]
    %v443 = vld [vmem:[%s3 + $0x78] sm:$0xf]
    %v444 = vld [vmem:[%s3 + $0x7c] sm:$0xf]
    %v445 = vld [vmem:[%s4] sm:$0x1]
    %v447 = vlaneseq
    %v448 = vshrl.u32 %v447, 7
    %v449 = vsub.s32 0, %v448
    %v450 = vrot.slane %v445, %v449
    %v484 = vunpack.c.l.b16 %v413
    %v485 = vunpack.c.l.b16 %v414
    %v486 = vunpack.c.l.b16 %v415
    %v487 = vunpack.c.l.b16 %v416
    %v488 = vunpack.c.l.b16 %v417
    %v489 = vunpack.c.l.b16 %v418
    %v490 = vunpack.c.l.b16 %v419
    %v491 = vunpack.c.l.b16 %v420
    %v492 = vunpack.c.l.b16 %v421
    %v493 = vunpack.c.l.b16 %v422
    %v494 = vunpack.c.l.b16 %v423
    %v495 = vunpack.c.l.b16 %v424
    %v496 = vunpack.c.l.b16 %v425
    %v497 = vunpack.c.l.b16 %v426
    %v498 = vunpack.c.l.b16 %v427
    %v499 = vunpack.c.l.b16 %v428
    %v500 = vunpack.c.l.b16 %v429
    %v501 = vunpack.c.l.b16 %v430
    %v502 = vunpack.c.l.b16 %v431
    %v503 = vunpack.c.l.b16 %v432
    %v504 = vunpack.c.l.b16 %v433
    %v505 = vunpack.c.l.b16 %v434
    %v506 = vunpack.c.l.b16 %v435
    %v507 = vunpack.c.l.b16 %v436
    %v508 = vunpack.c.l.b16 %v437
    %v509 = vunpack.c.l.b16 %v438
    %v510 = vunpack.c.l.b16 %v439
    %v511 = vunpack.c.l.b16 %v440
    %v512 = vunpack.c.l.b16 %v441
    %v513 = vunpack.c.l.b16 %v442
    %v514 = vunpack.c.l.b16 %v443
    %v515 = vunpack.c.l.b16 %v444
    %v516 = vpack.c.b16 %v485, %v484
    %v517 = vpack.c.b16 %v487, %v486
    %v518 = vpack.c.b16 %v489, %v488
    %v519 = vpack.c.b16 %v491, %v490
    %v520 = vpack.c.b16 %v493, %v492
    %v521 = vpack.c.b16 %v495, %v494
    %v522 = vpack.c.b16 %v497, %v496
    %v523 = vpack.c.b16 %v499, %v498
    %v524 = vpack.c.b16 %v501, %v500
    %v525 = vpack.c.b16 %v503, %v502
    %v526 = vpack.c.b16 %v505, %v504
    %v527 = vpack.c.b16 %v507, %v506
    %v528 = vpack.c.b16 %v509, %v508
    %v529 = vpack.c.b16 %v511, %v510
    %v530 = vpack.c.b16 %v513, %v512
    %v531 = vpack.c.b16 %v515, %v514
    %548 = vmatprep.subr.bf16.mxu0 0
    %549 = vmatpush1.bf16.msra.mxu0 %v516
    %550 = vmatprep.subr.bf16.mxu0 0
    %551 = vmatpush1.bf16.msra.mxu0 %v517
    %552 = vmatprep.subr.bf16.mxu0 0
    %553 = vmatpush1.bf16.msra.mxu0 %v518
    %554 = vmatprep.subr.bf16.mxu0 0
    %555 = vmatpush1.bf16.msra.mxu0 %v519
    %556 = vmatprep.subr.bf16.mxu0 0
    %557 = vmatpush1.bf16.msra.mxu0 %v520
    %558 = vmatprep.subr.bf16.mxu0 0
    %559 = vmatpush1.bf16.msra.mxu0 %v521
    %560 = vmatprep.subr.bf16.mxu0 0
    %561 = vmatpush1.bf16.msra.mxu0 %v522
    %562 = vmatprep.subr.bf16.mxu0 0
    %563 = vmatpush1.bf16.msra.mxu0 %v523
    %564 = vmatprep.subr.bf16.mxu0 0
    %565 = vmatpush1.bf16.msra.mxu0 %v524
    %566 = vmatprep.subr.bf16.mxu0 0
    %567 = vmatpush1.bf16.msra.mxu0 %v525
    %568 = vmatprep.subr.bf16.mxu0 0
    %569 = vmatpush1.bf16.msra.mxu0 %v526
    %570 = vmatprep.subr.bf16.mxu0 0
    %571 = vmatpush1.bf16.msra.mxu0 %v527
    %572 = vmatprep.subr.bf16.mxu0 0
    %573 = vmatpush1.bf16.msra.mxu0 %v528
    %574 = vmatprep.subr.bf16.mxu0 0
    %575 = vmatpush1.bf16.msra.mxu0 %v529
    %576 = vmatprep.subr.bf16.mxu0 0
    %577 = vmatpush1.bf16.msra.mxu0 %v530
    %578 = vmatprep.subr.bf16.mxu0 0
    %579 = vmatpush1.bf16.msra.mxu0 %v531
    %580 = vmatprep.mubr.bf16.mxu0 %v398
    %581 = vmatmul.mubr.bf16.gmra.mrb[0].mxu0 %v397
    %v582 = vpop.f32.mrb[0].mxu0
    %v583 = vadd.f32 %v450, %v582
    %v584 = vpop.f32.mrb[0].mxu0
    %v585 = vpop.f32.mrb[0].mxu0
    %v586 = vadd.f32 %v450, %v585
    %v587 = vpop.f32.mrb[0].mxu0
    %588 = vmatprep.mubr.bf16.mxu0 %v400
    %589 = vmatmul.mubr.bf16.gmra.mrb[0].mxu0 %v399
    %v590 = vpop.f32.mrb[0].mxu0
    %v591 = vadd.f32 %v450, %v590
    %v592 = vpop.f32.mrb[0].mxu0
    %v593 = vpop.f32.mrb[0].mxu0
    %v594 = vadd.f32 %v450, %v593
    %v595 = vpop.f32.mrb[0].mxu0
    %596 = vmatprep.mubr.bf16.mxu0 %v402
    %597 = vmatmul.mubr.bf16.gmra.mrb[0].mxu0 %v401
    %v598 = vpop.f32.mrb[0].mxu0
    %v599 = vadd.f32 %v450, %v598
    %v600 = vpop.f32.mrb[0].mxu0
    %v601 = vpop.f32.mrb[0].mxu0
    %v602 = vadd.f32 %v450, %v601
    %v603 = vpop.f32.mrb[0].mxu0
    %604 = vmatprep.mubr.bf16.mxu0 %v404
    %605 = vmatmul.mubr.bf16.gmra.mrb[0].mxu0 %v403
    %v606 = vpop.f32.mrb[0].mxu0
    %v607 = vadd.f32 %v450, %v606
    %v608 = vpop.f32.mrb[0].mxu0
    %v609 = vpop.f32.mrb[0].mxu0
    %v610 = vadd.f32 %v450, %v609
    %v611 = vpop.f32.mrb[0].mxu0
    %612 = vmatprep.mubr.bf16.mxu0 %v406
    %613 = vmatmul.mubr.bf16.gmra.mrb[0].mxu0 %v405
    %v614 = vpop.f32.mrb[0].mxu0
    %v615 = vadd.f32 %v450, %v614
    %v616 = vpop.f32.mrb[0].mxu0
    %v617 = vpop.f32.mrb[0].mxu0
    %v618 = vadd.f32 %v450, %v617
    %v619 = vpop.f32.mrb[0].mxu0
    %620 = vmatprep.mubr.bf16.mxu0 %v408
    %621 = vmatmul.mubr.bf16.gmra.mrb[0].mxu0 %v407
    %v622 = vpop.f32.mrb[0].mxu0
    %v623 = vadd.f32 %v450, %v622
    %v624 = vpop.f32.mrb[0].mxu0
    %v625 = vpop.f32.mrb[0].mxu0
    %v626 = vadd.f32 %v450, %v625
    %v627 = vpop.f32.mrb[0].mxu0
    %628 = vmatprep.mubr.bf16.mxu0 %v410
    %629 = vmatmul.mubr.bf16.gmra.mrb[0].mxu0 %v409
    %v630 = vpop.f32.mrb[0].mxu0
    %v631 = vadd.f32 %v450, %v630
    %v632 = vpop.f32.mrb[0].mxu0
    %v633 = vpop.f32.mrb[0].mxu0
    %v634 = vadd.f32 %v450, %v633
    %v635 = vpop.f32.mrb[0].mxu0
    %636 = vmatprep.mubr.bf16.mxu0 %v412
    %637 = vmatmul.mubr.bf16.gmra.mrb[0].mxu0 %v411
    %v638 = vpop.f32.mrb[0].mxu0
    %v639 = vadd.f32 %v450, %v638
    %v640 = vpop.f32.mrb[0].mxu0
    %v641 = vpop.f32.mrb[0].mxu0
    %v642 = vadd.f32 %v450, %v641
    %v643 = vpop.f32.mrb[0].mxu0
    %644 = vdwg.mxu0
    %v645 = vpack.c.bf16 %v586, %v583
    %v646 = vpack.c.bf16 %v594, %v591
    %v647 = vpack.c.bf16 %v602, %v599
    %v648 = vpack.c.bf16 %v610, %v607
    %v649 = vpack.c.bf16 %v618, %v615
    %v650 = vpack.c.bf16 %v626, %v623
    %v651 = vpack.c.bf16 %v634, %v631
    %v652 = vpack.c.bf16 %v642, %v639
    %v661 = vunpack.c.l.b16 %v645
    %v662 = vunpack.c.h.b16 %v645
    %v663 = vunpack.c.l.b16 %v646
    %v664 = vunpack.c.h.b16 %v646
    %v665 = vunpack.c.l.b16 %v647
    %v666 = vunpack.c.h.b16 %v647
    %v667 = vunpack.c.l.b16 %v648
    %v668 = vunpack.c.h.b16 %v648
    %v669 = vunpack.c.l.b16 %v649
    %v670 = vunpack.c.h.b16 %v649
    %v671 = vunpack.c.l.b16 %v650
    %v672 = vunpack.c.h.b16 %v650
    %v673 = vunpack.c.l.b16 %v651
    %v674 = vunpack.c.h.b16 %v651
    %v675 = vunpack.c.l.b16 %v652
    %v676 = vunpack.c.h.b16 %v652
    %v677 = vpack.c.b16 %v661, %v661
    %v678 = vpack.c.b16 %v662, %v662
    %v679 = vpack.c.b16 %v663, %v663
    %v680 = vpack.c.b16 %v664, %v664
    %v681 = vpack.c.b16 %v665, %v665
    %v682 = vpack.c.b16 %v666, %v666
    %v683 = vpack.c.b16 %v667, %v667
    %v684 = vpack.c.b16 %v668, %v668
    %v685 = vpack.c.b16 %v669, %v669
    %v686 = vpack.c.b16 %v670, %v670
    %v687 = vpack.c.b16 %v671, %v671
    %v688 = vpack.c.b16 %v672, %v672
    %v689 = vpack.c.b16 %v673, %v673
    %v690 = vpack.c.b16 %v674, %v674
    %v691 = vpack.c.b16 %v675, %v675
    %v692 = vpack.c.b16 %v676, %v676
    %709 = vst [vmem:[%s5] sm:$0xf] %v677
    %710 = vst [vmem:[%s5 + $0x4] sm:$0xf] %v678
    %711 = vst [vmem:[%s5 + $0x8] sm:$0xf] %v679
    %712 = vst [vmem:[%s5 + $0xc] sm:$0xf] %v680
    %713 = vst [vmem:[%s5 + $0x10] sm:$0xf] %v681
    %714 = vst [vmem:[%s5 + $0x14] sm:$0xf] %v682
    %715 = vst [vmem:[%s5 + $0x18] sm:$0xf] %v683
    %716 = vst [vmem:[%s5 + $0x1c] sm:$0xf] %v684
    %717 = vst [vmem:[%s5 + $0x20] sm:$0xf] %v685
    %718 = vst [vmem:[%s5 + $0x24] sm:$0xf] %v686
    %719 = vst [vmem:[%s5 + $0x28] sm:$0xf] %v687
    %720 = vst [vmem:[%s5 + $0x2c] sm:$0xf] %v688
    %721 = vst [vmem:[%s5 + $0x30] sm:$0xf] %v689
    %722 = vst [vmem:[%s5 + $0x34] sm:$0xf] %v690
    %723 = vst [vmem:[%s5 + $0x38] sm:$0xf] %v691
    %724 = vst [vmem:[%s5 + $0x3c] sm:$0xf] %v692
  $region29: #{gnn_forward.4} parent=0 // pred_fallthru
    _
  // Predicated region
  $region30: #{gnn_forward.4} parent=0 // pred_check
    _
  $region31: #{gnn_forward.4} parent=0 // pred_check_branch
    %726 = sbr.rel (0) target = $region33
  $region32: #{gnn_forward.4} parent=0 // pred_region
    _
  $region33: #{gnn_forward.4} parent=0 // pred_fallthru
    _
  // Predicated region
  $region34: #{gnn_forward.4} parent=0 // pred_check
    _
  $region35: #{gnn_forward.4} parent=0 // pred_check_branch
    %728 = sbr.rel (0) target = $region37
  $region36: #{gnn_forward.4} parent=0 // pred_region
    _
  $region37: #{gnn_forward.4} parent=0 // pred_fallthru
    _

// kernel: gnn_forward.3
$region0: #{gnn_forward.3}
  #allocation0 [shape = 'u32[]', space=smem, size = 0x4, offset = 0x4, fixed_abs, tag = 'smem constant byte address 0x4 - core index']
  #allocation1 [shape = 'u32[144,128]{1,0:T(1,128)}', space=vmem, size = 0x12000, scoped, tag = 'internal scratch']
  #allocation2 [shape = 'f32[128,256]{1,0:T(8,128)}', space=vmem, size = 0x20000, scoped, tag = 'scratch operand']
  %s0 = inlined_call_operand.vmem [shape: bf16[128,128], index: 0, kind: input, shape index: {}]
  %s1 = inlined_call_operand.vmem [shape: bf16[128,128], index: 1, kind: input, shape index: {}, may-alias: {1,2}]
  %s2 = inlined_call_operand.vmem [shape: bf16[128,128], index: 2, kind: input, shape index: {}, may-alias: {1,2}]
  %s3 = inlined_call_operand.vmem [shape: bf16[256,128], index: 3, kind: input, shape index: {}]
  %s4 = inlined_call_operand.vmem [shape: f32[1,128], index: 4, kind: input, shape index: {}]
  %s5 = inlined_call_operand.vmem [shape: bf16[128,128], index: 5, kind: output, shape index: {}]
  %s6 = sld [smem:[#allocation0]]
  $region38: #{gnn_forward.3} parent=0
    _
  %s8 = ssub.s32 1, %s6
  %s9 = scalar_select 0, %s8, %s6
  // Predicated region
  $region2: #{gnn_forward.3} parent=0 // pred_check
    _
  $region3: #{gnn_forward.3} parent=0 // pred_check_branch
    %11 = sbr.rel (0) target = $region5
  $region4: #{gnn_forward.3} parent=0 // pred_region
    _
  $region5: #{gnn_forward.3} parent=0 // pred_fallthru
    _
  // Predicated region
  $region6: #{gnn_forward.3} parent=0 // pred_check
    _
  $region7: #{gnn_forward.3} parent=0 // pred_check_branch
    %13 = sbr.rel (0) target = $region9
  $region8: #{gnn_forward.3} parent=0 // pred_region
    _
  $region9: #{gnn_forward.3} parent=0 // pred_fallthru
    _
  // Predicated region
  $region10: #{gnn_forward.3} parent=0 // pred_check
    _
  $region11: #{gnn_forward.3} parent=0 // pred_check_branch
    %15 = sbr.rel (0) target = $region13
  $region12: #{gnn_forward.3} parent=0 // pred_region
    _
  $region13: #{gnn_forward.3} parent=0 // pred_fallthru
    _
  // Predicated region
  $region14: #{gnn_forward.3} parent=0 // pred_check
    _
  $region15: #{gnn_forward.3} parent=0 // pred_check_branch
    %17 = sbr.rel (0) target = $region17
  $region16: #{gnn_forward.3} parent=0 // pred_region
    _
  $region17: #{gnn_forward.3} parent=0 // pred_fallthru
    _
  // Predicated region
  $region18: #{gnn_forward.3} parent=0 // pred_check
    _
  $region19: #{gnn_forward.3} parent=0 // pred_check_branch
    %19 = sbr.rel (0) target = $region21
  $region20: #{gnn_forward.3} parent=0 // pred_region
    _
  $region21: #{gnn_forward.3} parent=0 // pred_fallthru
    _
  %p21 = scmp.eq.s32.totalorder 0, 0
  // Predicated region
  $region22: #{gnn_forward.3} parent=0 // pred_check
    %p22 = pneg %p21
  $region23: #{gnn_forward.3} parent=0 // pred_check_branch
    %24 = sbr.rel (%p22) target = $region25
  $region24: #{gnn_forward.3} parent=0 // pred_region
    %25 = vst [vmem:[#allocation2] sm:$0xff] 0.0
    %26 = vst [vmem:[#allocation2 + $0x10] sm:$0xff] 0.0
    %27 = vst [vmem:[#allocation2 + $0x20] sm:$0xff] 0.0
    %28 = vst [vmem:[#allocation2 + $0x30] sm:$0xff] 0.0
    %29 = vst [vmem:[#allocation2 + $0x40] sm:$0xff] 0.0
    %30 = vst [vmem:[#allocation2 + $0x50] sm:$0xff] 0.0
    %31 = vst [vmem:[#allocation2 + $0x60] sm:$0xff] 0.0
    %32 = vst [vmem:[#allocation2 + $0x70] sm:$0xff] 0.0
    %33 = vst [vmem:[#allocation2 + $0x80] sm:$0xff] 0.0
    %34 = vst [vmem:[#allocation2 + $0x90] sm:$0xff] 0.0
    %35 = vst [vmem:[#allocation2 + $0xa0] sm:$0xff] 0.0
    %36 = vst [vmem:[#allocation2 + $0xb0] sm:$0xff] 0.0
    %37 = vst [vmem:[#allocation2 + $0xc0] sm:$0xff] 0.0
    %38 = vst [vmem:[#allocation2 + $0xd0] sm:$0xff] 0.0
    %39 = vst [vmem:[#allocation2 + $0xe0] sm:$0xff] 0.0
    %40 = vst [vmem:[#allocation2 + $0xf0] sm:$0xff] 0.0
    %v41 = vld [vmem:[%s2] sm:$0xf]
    %v42 = vld [vmem:[%s2 + $0x4] sm:$0xf]
    %v43 = vld [vmem:[%s2 + $0x8] sm:$0xf]
    %v44 = vld [vmem:[%s2 + $0xc] sm:$0xf]
    %v45 = vld [vmem:[%s2 + $0x10] sm:$0xf]
    %v46 = vld [vmem:[%s2 + $0x14] sm:$0xf]
    %v47 = vld [vmem:[%s2 + $0x18] sm:$0xf]
    %v48 = vld [vmem:[%s2 + $0x1c] sm:$0xf]
    %v49 = vld [vmem:[%s2 + $0x20] sm:$0xf]
    %v50 = vld [vmem:[%s2 + $0x24] sm:$0xf]
    %v51 = vld [vmem:[%s2 + $0x28] sm:$0xf]
    %v52 = vld [vmem:[%s2 + $0x2c] sm:$0xf]
    %v53 = vld [vmem:[%s2 + $0x30] sm:$0xf]
    %v54 = vld [vmem:[%s2 + $0x34] sm:$0xf]
    %v55 = vld [vmem:[%s2 + $0x38] sm:$0xf]
    %v56 = vld [vmem:[%s2 + $0x3c] sm:$0xf]
    %v57 = vunpack.c.l.bf16 %v41
    %v58 = vunpack.c.l.bf16 %v42
    %v59 = vunpack.c.l.bf16 %v43
    %v60 = vunpack.c.l.bf16 %v44
    %v61 = vunpack.c.l.bf16 %v45
    %v62 = vunpack.c.l.bf16 %v46
    %v63 = vunpack.c.l.bf16 %v47
    %v64 = vunpack.c.l.bf16 %v48
    %v65 = vunpack.c.l.bf16 %v49
    %v66 = vunpack.c.l.bf16 %v50
    %v67 = vunpack.c.l.bf16 %v51
    %v68 = vunpack.c.l.bf16 %v52
    %v69 = vunpack.c.l.bf16 %v53
    %v70 = vunpack.c.l.bf16 %v54
    %v71 = vunpack.c.l.bf16 %v55
    %v72 = vunpack.c.l.bf16 %v56
    %73 = vst [vmem:[#allocation2 + $0x8] sm:$0xff] %v57
    %74 = vst [vmem:[#allocation2 + $0x18] sm:$0xff] %v58
    %75 = vst [vmem:[#allocation2 + $0x28] sm:$0xff] %v59
    %76 = vst [vmem:[#allocation2 + $0x38] sm:$0xff] %v60
    %77 = vst [vmem:[#allocation2 + $0x48] sm:$0xff] %v61
    %78 = vst [vmem:[#allocation2 + $0x58] sm:$0xff] %v62
    %79 = vst [vmem:[#allocation2 + $0x68] sm:$0xff] %v63
    %80 = vst [vmem:[#allocation2 + $0x78] sm:$0xff] %v64
    %81 = vst [vmem:[#allocation2 + $0x88] sm:$0xff] %v65
    %82 = vst [vmem:[#allocation2 + $0x98] sm:$0xff] %v66
    %83 = vst [vmem:[#allocation2 + $0xa8] sm:$0xff] %v67
    %84 = vst [vmem:[#allocation2 + $0xb8] sm:$0xff] %v68
    %85 = vst [vmem:[#allocation2 + $0xc8] sm:$0xff] %v69
    %86 = vst [vmem:[#allocation2 + $0xd8] sm:$0xff] %v70
    %87 = vst [vmem:[#allocation2 + $0xe8] sm:$0xff] %v71
    %88 = vst [vmem:[#allocation2 + $0xf8] sm:$0xff] %v72
  $region25: #{gnn_forward.3} parent=0 // pred_fallthru
    _
  %v89 = vld [vmem:[#allocation2] sm:$0xff]
  %v90 = vld [vmem:[#allocation2 + $0x10] sm:$0xff]
  %v91 = vld [vmem:[#allocation2 + $0x20] sm:$0xff]
  %v92 = vld [vmem:[#allocation2 + $0x30] sm:$0xff]
  %v93 = vld [vmem:[#allocation2 + $0x40] sm:$0xff]
  %v94 = vld [vmem:[#allocation2 + $0x50] sm:$0xff]
  %v95 = vld [vmem:[#allocation2 + $0x60] sm:$0xff]
  %v96 = vld [vmem:[#allocation2 + $0x70] sm:$0xff]
  %v97 = vld [vmem:[#allocation2 + $0x80] sm:$0xff]
  %v98 = vld [vmem:[#allocation2 + $0x90] sm:$0xff]
  %v99 = vld [vmem:[#allocation2 + $0xa0] sm:$0xff]
  %v100 = vld [vmem:[#allocation2 + $0xb0] sm:$0xff]
  %v101 = vld [vmem:[#allocation2 + $0xc0] sm:$0xff]
  %v102 = vld [vmem:[#allocation2 + $0xd0] sm:$0xff]
  %v103 = vld [vmem:[#allocation2 + $0xe0] sm:$0xff]
  %v104 = vld [vmem:[#allocation2 + $0xf0] sm:$0xff]
  %v105 = vld [vmem:[%s0] sm:$0xf]
  %v106 = vld [vmem:[%s0 + $0x4] sm:$0xf]
  %v107 = vld [vmem:[%s0 + $0x8] sm:$0xf]
  %v108 = vld [vmem:[%s0 + $0xc] sm:$0xf]
  %v109 = vld [vmem:[%s0 + $0x10] sm:$0xf]
  %v110 = vld [vmem:[%s0 + $0x14] sm:$0xf]
  %v111 = vld [vmem:[%s0 + $0x18] sm:$0xf]
  %v112 = vld [vmem:[%s0 + $0x1c] sm:$0xf]
  %v113 = vld [vmem:[%s0 + $0x20] sm:$0xf]
  %v114 = vld [vmem:[%s0 + $0x24] sm:$0xf]
  %v115 = vld [vmem:[%s0 + $0x28] sm:$0xf]
  %v116 = vld [vmem:[%s0 + $0x2c] sm:$0xf]
  %v117 = vld [vmem:[%s0 + $0x30] sm:$0xf]
  %v118 = vld [vmem:[%s0 + $0x34] sm:$0xf]
  %v119 = vld [vmem:[%s0 + $0x38] sm:$0xf]
  %v120 = vld [vmem:[%s0 + $0x3c] sm:$0xf]
  %v121 = vld [vmem:[%s1] sm:$0xf]
  %v122 = vld [vmem:[%s1 + $0x4] sm:$0xf]
  %v123 = vld [vmem:[%s1 + $0x8] sm:$0xf]
  %v124 = vld [vmem:[%s1 + $0xc] sm:$0xf]
  %v125 = vld [vmem:[%s1 + $0x10] sm:$0xf]
  %v126 = vld [vmem:[%s1 + $0x14] sm:$0xf]
  %v127 = vld [vmem:[%s1 + $0x18] sm:$0xf]
  %v128 = vld [vmem:[%s1 + $0x1c] sm:$0xf]
  %v129 = vld [vmem:[%s1 + $0x20] sm:$0xf]
  %v130 = vld [vmem:[%s1 + $0x24] sm:$0xf]
  %v131 = vld [vmem:[%s1 + $0x28] sm:$0xf]
  %v132 = vld [vmem:[%s1 + $0x2c] sm:$0xf]
  %v133 = vld [vmem:[%s1 + $0x30] sm:$0xf]
  %v134 = vld [vmem:[%s1 + $0x34] sm:$0xf]
  %v135 = vld [vmem:[%s1 + $0x38] sm:$0xf]
  %v136 = vld [vmem:[%s1 + $0x3c] sm:$0xf]
  %v153 = vunpack.c.l.b16 %v105
  %v154 = vunpack.c.l.b16 %v106
  %v155 = vunpack.c.l.b16 %v107
  %v156 = vunpack.c.l.b16 %v108
  %v157 = vunpack.c.l.b16 %v109
  %v158 = vunpack.c.l.b16 %v110
  %v159 = vunpack.c.l.b16 %v111
  %v160 = vunpack.c.l.b16 %v112
  %v161 = vunpack.c.l.b16 %v113
  %v162 = vunpack.c.l.b16 %v114
  %v163 = vunpack.c.l.b16 %v115
  %v164 = vunpack.c.l.b16 %v116
  %v165 = vunpack.c.l.b16 %v117
  %v166 = vunpack.c.l.b16 %v118
  %v167 = vunpack.c.l.b16 %v119
  %v168 = vunpack.c.l.b16 %v120
  %v169 = vpack.c.b16 %v154, %v153
  %v170 = vpack.c.b16 %v156, %v155
  %v171 = vpack.c.b16 %v158, %v157
  %v172 = vpack.c.b16 %v160, %v159
  %v173 = vpack.c.b16 %v162, %v161
  %v174 = vpack.c.b16 %v164, %v163
  %v175 = vpack.c.b16 %v166, %v165
  %v176 = vpack.c.b16 %v168, %v167
  %v201 = vunpack.c.l.b16 %v121
  %v202 = vunpack.c.l.b16 %v122
  %v203 = vunpack.c.l.b16 %v123
  %v204 = vunpack.c.l.b16 %v124
  %v205 = vunpack.c.l.b16 %v125
  %v206 = vunpack.c.l.b16 %v126
  %v207 = vunpack.c.l.b16 %v127
  %v208 = vunpack.c.l.b16 %v128
  %v209 = vunpack.c.l.b16 %v129
  %v210 = vunpack.c.l.b16 %v130
  %v211 = vunpack.c.l.b16 %v131
  %v212 = vunpack.c.l.b16 %v132
  %v213 = vunpack.c.l.b16 %v133
  %v214 = vunpack.c.l.b16 %v134
  %v215 = vunpack.c.l.b16 %v135
  %v216 = vunpack.c.l.b16 %v136
  %v217 = vpack.c.b16 %v202, %v201
  %v218 = vpack.c.b16 %v204, %v203
  %v219 = vpack.c.b16 %v206, %v205
  %v220 = vpack.c.b16 %v208, %v207
  %v221 = vpack.c.b16 %v210, %v209
  %v222 = vpack.c.b16 %v212, %v211
  %v223 = vpack.c.b16 %v214, %v213
  %v224 = vpack.c.b16 %v216, %v215
  %233 = vmatprep.subr.bf16.mxu0 0
  %234 = vmatpush1.bf16.msra.mxu0 %v217
  %235 = vmatprep.subr.bf16.mxu0 0
  %236 = vmatpush1.bf16.msra.mxu0 %v218
  %237 = vmatprep.subr.bf16.mxu0 0
  %238 = vmatpush1.bf16.msra.mxu0 %v219
  %239 = vmatprep.subr.bf16.mxu0 0
  %240 = vmatpush1.bf16.msra.mxu0 %v220
  %241 = vmatprep.subr.bf16.mxu0 0
  %242 = vmatpush1.bf16.msra.mxu0 %v221
  %243 = vmatprep.subr.bf16.mxu0 0
  %244 = vmatpush1.bf16.msra.mxu0 %v222
  %245 = vmatprep.subr.bf16.mxu0 0
  %246 = vmatpush1.bf16.msra.mxu0 %v223
  %247 = vmatprep.subr.bf16.mxu0 0
  %248 = vmatpush1.bf16.msra.mxu0 %v224
  %249 = vmatprep.subr.bf16.mxu0 0
  %250 = vmatpush1.bf16.msra.mxu0 0
  %251 = vmatprep.subr.bf16.mxu0 0
  %252 = vmatpush1.bf16.msra.mxu0 0
  %253 = vmatprep.subr.bf16.mxu0 0
  %254 = vmatpush1.bf16.msra.mxu0 0
  %255 = vmatprep.subr.bf16.mxu0 0
  %256 = vmatpush1.bf16.msra.mxu0 0
  %257 = vmatprep.subr.bf16.mxu0 0
  %258 = vmatpush1.bf16.msra.mxu0 0
  %259 = vmatprep.subr.bf16.mxu0 0
  %260 = vmatpush1.bf16.msra.mxu0 0
  %261 = vmatprep.subr.bf16.mxu0 0
  %262 = vmatpush1.bf16.msra.mxu0 0
  %263 = vmatprep.subr.bf16.mxu0 0
  %264 = vmatpush1.bf16.msra.mxu0 0
  %265 = vmatprep.mubr.bf16.mxu0 0
  %266 = vmatmul.mubr.bf16.gmra.mrb[0].mxu0 %v169
  %v267 = vpop.f32.mrb[0].mxu0
  %v268 = vadd.f32 0.0, %v267
  %v269 = vpop.f32.mrb[0].mxu0
  %v270 = vpop.f32.mrb[0].mxu0
  %v271 = vadd.f32 0.0, %v270
  %v272 = vpop.f32.mrb[0].mxu0
  %273 = vmatprep.mubr.bf16.mxu0 0
  %274 = vmatmul.mubr.bf16.gmra.mrb[0].mxu0 %v170
  %v275 = vpop.f32.mrb[0].mxu0
  %v276 = vadd.f32 0.0, %v275
  %v277 = vpop.f32.mrb[0].mxu0
  %v278 = vpop.f32.mrb[0].mxu0
  %v279 = vadd.f32 0.0, %v278
  %v280 = vpop.f32.mrb[0].mxu0
  %281 = vmatprep.mubr.bf16.mxu0 0
  %282 = vmatmul.mubr.bf16.gmra.mrb[0].mxu0 %v171
  %v283 = vpop.f32.mrb[0].mxu0
  %v284 = vadd.f32 0.0, %v283
  %v285 = vpop.f32.mrb[0].mxu0
  %v286 = vpop.f32.mrb[0].mxu0
  %v287 = vadd.f32 0.0, %v286
  %v288 = vpop.f32.mrb[0].mxu0
  %289 = vmatprep.mubr.bf16.mxu0 0
  %290 = vmatmul.mubr.bf16.gmra.mrb[0].mxu0 %v172
  %v291 = vpop.f32.mrb[0].mxu0
  %v292 = vadd.f32 0.0, %v291
  %v293 = vpop.f32.mrb[0].mxu0
  %v294 = vpop.f32.mrb[0].mxu0
  %v295 = vadd.f32 0.0, %v294
  %v296 = vpop.f32.mrb[0].mxu0
  %297 = vmatprep.mubr.bf16.mxu0 0
  %298 = vmatmul.mubr.bf16.gmra.mrb[0].mxu0 %v173
  %v299 = vpop.f32.mrb[0].mxu0
  %v300 = vadd.f32 0.0, %v299
  %v301 = vpop.f32.mrb[0].mxu0
  %v302 = vpop.f32.mrb[0].mxu0
  %v303 = vadd.f32 0.0, %v302
  %v304 = vpop.f32.mrb[0].mxu0
  %305 = vmatprep.mubr.bf16.mxu0 0
  %306 = vmatmul.mubr.bf16.gmra.mrb[0].mxu0 %v174
  %v307 = vpop.f32.mrb[0].mxu0
  %v308 = vadd.f32 0.0, %v307
  %v309 = vpop.f32.mrb[0].mxu0
  %v310 = vpop.f32.mrb[0].mxu0
  %v311 = vadd.f32 0.0, %v310
  %v312 = vpop.f32.mrb[0].mxu0
  %313 = vmatprep.mubr.bf16.mxu0 0
  %314 = vmatmul.mubr.bf16.gmra.mrb[0].mxu0 %v175
  %v315 = vpop.f32.mrb[0].mxu0
  %v316 = vadd.f32 0.0, %v315
  %v317 = vpop.f32.mrb[0].mxu0
  %v318 = vpop.f32.mrb[0].mxu0
  %v319 = vadd.f32 0.0, %v318
  %v320 = vpop.f32.mrb[0].mxu0
  %321 = vmatprep.mubr.bf16.mxu0 0
  %322 = vmatmul.mubr.bf16.gmra.mrb[0].mxu0 %v176
  %v323 = vpop.f32.mrb[0].mxu0
  %v324 = vadd.f32 0.0, %v323
  %v325 = vpop.f32.mrb[0].mxu0
  %v326 = vpop.f32.mrb[0].mxu0
  %v327 = vadd.f32 0.0, %v326
  %v328 = vpop.f32.mrb[0].mxu0
  %329 = vdwg.mxu0
  %v330 = vadd.f32 %v89, %v268
  %v331 = vadd.f32 %v90, %v271
  %v332 = vadd.f32 %v91, %v276
  %v333 = vadd.f32 %v92, %v279
  %v334 = vadd.f32 %v93, %v284
  %v335 = vadd.f32 %v94, %v287
  %v336 = vadd.f32 %v95, %v292
  %v337 = vadd.f32 %v96, %v295
  %v338 = vadd.f32 %v97, %v300
  %v339 = vadd.f32 %v98, %v303
  %v340 = vadd.f32 %v99, %v308
  %v341 = vadd.f32 %v100, %v311
  %v342 = vadd.f32 %v101, %v316
  %v343 = vadd.f32 %v102, %v319
  %v344 = vadd.f32 %v103, %v324
  %v345 = vadd.f32 %v104, %v327
  %346 = vst [vmem:[#allocation2] sm:$0xff] %v330
  %347 = vst [vmem:[#allocation2 + $0x10] sm:$0xff] %v331
  %348 = vst [vmem:[#allocation2 + $0x20] sm:$0xff] %v332
  %349 = vst [vmem:[#allocation2 + $0x30] sm:$0xff] %v333
  %350 = vst [vmem:[#allocation2 + $0x40] sm:$0xff] %v334
  %351 = vst [vmem:[#allocation2 + $0x50] sm:$0xff] %v335
  %352 = vst [vmem:[#allocation2 + $0x60] sm:$0xff] %v336
  %353 = vst [vmem:[#allocation2 + $0x70] sm:$0xff] %v337
  %354 = vst [vmem:[#allocation2 + $0x80] sm:$0xff] %v338
  %355 = vst [vmem:[#allocation2 + $0x90] sm:$0xff] %v339
  %356 = vst [vmem:[#allocation2 + $0xa0] sm:$0xff] %v340
  %357 = vst [vmem:[#allocation2 + $0xb0] sm:$0xff] %v341
  %358 = vst [vmem:[#allocation2 + $0xc0] sm:$0xff] %v342
  %359 = vst [vmem:[#allocation2 + $0xd0] sm:$0xff] %v343
  %360 = vst [vmem:[#allocation2 + $0xe0] sm:$0xff] %v344
  %361 = vst [vmem:[#allocation2 + $0xf0] sm:$0xff] %v345
  // Predicated region
  $region26: #{gnn_forward.3} parent=0 // pred_check
    %p362 = pneg %p21
  $region27: #{gnn_forward.3} parent=0 // pred_check_branch
    %364 = sbr.rel (%p362) target = $region29
  $region28: #{gnn_forward.3} parent=0 // pred_region
    %v365 = vld [vmem:[#allocation2] sm:$0xff]
    %v366 = vld [vmem:[#allocation2 + $0x8] sm:$0xff]
    %v367 = vld [vmem:[#allocation2 + $0x10] sm:$0xff]
    %v368 = vld [vmem:[#allocation2 + $0x18] sm:$0xff]
    %v369 = vld [vmem:[#allocation2 + $0x20] sm:$0xff]
    %v370 = vld [vmem:[#allocation2 + $0x28] sm:$0xff]
    %v371 = vld [vmem:[#allocation2 + $0x30] sm:$0xff]
    %v372 = vld [vmem:[#allocation2 + $0x38] sm:$0xff]
    %v373 = vld [vmem:[#allocation2 + $0x40] sm:$0xff]
    %v374 = vld [vmem:[#allocation2 + $0x48] sm:$0xff]
    %v375 = vld [vmem:[#allocation2 + $0x50] sm:$0xff]
    %v376 = vld [vmem:[#allocation2 + $0x58] sm:$0xff]
    %v377 = vld [vmem:[#allocation2 + $0x60] sm:$0xff]
    %v378 = vld [vmem:[#allocation2 + $0x68] sm:$0xff]
    %v379 = vld [vmem:[#allocation2 + $0x70] sm:$0xff]
    %v380 = vld [vmem:[#allocation2 + $0x78] sm:$0xff]
    %v381 = vld [vmem:[#allocation2 + $0x80] sm:$0xff]
    %v382 = vld [vmem:[#allocation2 + $0x88] sm:$0xff]
    %v383 = vld [vmem:[#allocation2 + $0x90] sm:$0xff]
    %v384 = vld [vmem:[#allocation2 + $0x98] sm:$0xff]
    %v385 = vld [vmem:[#allocation2 + $0xa0] sm:$0xff]
    %v386 = vld [vmem:[#allocation2 + $0xa8] sm:$0xff]
    %v387 = vld [vmem:[#allocation2 + $0xb0] sm:$0xff]
    %v388 = vld [vmem:[#allocation2 + $0xb8] sm:$0xff]
    %v389 = vld [vmem:[#allocation2 + $0xc0] sm:$0xff]
    %v390 = vld [vmem:[#allocation2 + $0xc8] sm:$0xff]
    %v391 = vld [vmem:[#allocation2 + $0xd0] sm:$0xff]
    %v392 = vld [vmem:[#allocation2 + $0xd8] sm:$0xff]
    %v393 = vld [vmem:[#allocation2 + $0xe0] sm:$0xff]
    %v394 = vld [vmem:[#allocation2 + $0xe8] sm:$0xff]
    %v395 = vld [vmem:[#allocation2 + $0xf0] sm:$0xff]
    %v396 = vld [vmem:[#allocation2 + $0xf8] sm:$0xff]
    %v397 = vpack.c.bf16 %v367, %v365
    %v398 = vpack.c.bf16 %v368, %v366
    %v399 = vpack.c.bf16 %v371, %v369
    %v400 = vpack.c.bf16 %v372, %v370
    %v401 = vpack.c.bf16 %v375, %v373
    %v402 = vpack.c.bf16 %v376, %v374
    %v403 = vpack.c.bf16 %v379, %v377
    %v404 = vpack.c.bf16 %v380, %v378
    %v405 = vpack.c.bf16 %v383, %v381
    %v406 = vpack.c.bf16 %v384, %v382
    %v407 = vpack.c.bf16 %v387, %v385
    %v408 = vpack.c.bf16 %v388, %v386
    %v409 = vpack.c.bf16 %v391, %v389
    %v410 = vpack.c.bf16 %v392, %v390
    %v411 = vpack.c.bf16 %v395, %v393
    %v412 = vpack.c.bf16 %v396, %v394
    %v413 = vld [vmem:[%s3] sm:$0xf]
    %v414 = vld [vmem:[%s3 + $0x4] sm:$0xf]
    %v415 = vld [vmem:[%s3 + $0x8] sm:$0xf]
    %v416 = vld [vmem:[%s3 + $0xc] sm:$0xf]
    %v417 = vld [vmem:[%s3 + $0x10] sm:$0xf]
    %v418 = vld [vmem:[%s3 + $0x14] sm:$0xf]
    %v419 = vld [vmem:[%s3 + $0x18] sm:$0xf]
    %v420 = vld [vmem:[%s3 + $0x1c] sm:$0xf]
    %v421 = vld [vmem:[%s3 + $0x20] sm:$0xf]
    %v422 = vld [vmem:[%s3 + $0x24] sm:$0xf]
    %v423 = vld [vmem:[%s3 + $0x28] sm:$0xf]
    %v424 = vld [vmem:[%s3 + $0x2c] sm:$0xf]
    %v425 = vld [vmem:[%s3 + $0x30] sm:$0xf]
    %v426 = vld [vmem:[%s3 + $0x34] sm:$0xf]
    %v427 = vld [vmem:[%s3 + $0x38] sm:$0xf]
    %v428 = vld [vmem:[%s3 + $0x3c] sm:$0xf]
    %v429 = vld [vmem:[%s3 + $0x40] sm:$0xf]
    %v430 = vld [vmem:[%s3 + $0x44] sm:$0xf]
    %v431 = vld [vmem:[%s3 + $0x48] sm:$0xf]
    %v432 = vld [vmem:[%s3 + $0x4c] sm:$0xf]
    %v433 = vld [vmem:[%s3 + $0x50] sm:$0xf]
    %v434 = vld [vmem:[%s3 + $0x54] sm:$0xf]
    %v435 = vld [vmem:[%s3 + $0x58] sm:$0xf]
    %v436 = vld [vmem:[%s3 + $0x5c] sm:$0xf]
    %v437 = vld [vmem:[%s3 + $0x60] sm:$0xf]
    %v438 = vld [vmem:[%s3 + $0x64] sm:$0xf]
    %v439 = vld [vmem:[%s3 + $0x68] sm:$0xf]
    %v440 = vld [vmem:[%s3 + $0x6c] sm:$0xf]
    %v441 = vld [vmem:[%s3 + $0x70] sm:$0xf]
    %v442 = vld [vmem:[%s3 + $0x74] sm:$0xf]
    %v443 = vld [vmem:[%s3 + $0x78] sm:$0xf]
    %v444 = vld [vmem:[%s3 + $0x7c] sm:$0xf]
    %v445 = vld [vmem:[%s4] sm:$0x1]
    %v447 = vlaneseq
    %v448 = vshrl.u32 %v447, 7
    %v449 = vsub.s32 0, %v448
    %v450 = vrot.slane %v445, %v449
    %v484 = vunpack.c.l.b16 %v413
    %v485 = vunpack.c.l.b16 %v414
    %v486 = vunpack.c.l.b16 %v415
    %v487 = vunpack.c.l.b16 %v416
    %v488 = vunpack.c.l.b16 %v417
    %v489 = vunpack.c.l.b16 %v418
    %v490 = vunpack.c.l.b16 %v419
    %v491 = vunpack.c.l.b16 %v420
    %v492 = vunpack.c.l.b16 %v421
    %v493 = vunpack.c.l.b16 %v422
    %v494 = vunpack.c.l.b16 %v423
    %v495 = vunpack.c.l.b16 %v424
    %v496 = vunpack.c.l.b16 %v425
    %v497 = vunpack.c.l.b16 %v426
    %v498 = vunpack.c.l.b16 %v427
    %v499 = vunpack.c.l.b16 %v428
    %v500 = vunpack.c.l.b16 %v429
    %v501 = vunpack.c.l.b16 %v430
    %v502 = vunpack.c.l.b16 %v431
    %v503 = vunpack.c.l.b16 %v432
    %v504 = vunpack.c.l.b16 %v433
    %v505 = vunpack.c.l.b16 %v434
    %v506 = vunpack.c.l.b16 %v435
    %v507 = vunpack.c.l.b16 %v436
    %v508 = vunpack.c.l.b16 %v437
    %v509 = vunpack.c.l.b16 %v438
    %v510 = vunpack.c.l.b16 %v439
    %v511 = vunpack.c.l.b16 %v440
    %v512 = vunpack.c.l.b16 %v441
    %v513 = vunpack.c.l.b16 %v442
    %v514 = vunpack.c.l.b16 %v443
    %v515 = vunpack.c.l.b16 %v444
    %v516 = vpack.c.b16 %v485, %v484
    %v517 = vpack.c.b16 %v487, %v486
    %v518 = vpack.c.b16 %v489, %v488
    %v519 = vpack.c.b16 %v491, %v490
    %v520 = vpack.c.b16 %v493, %v492
    %v521 = vpack.c.b16 %v495, %v494
    %v522 = vpack.c.b16 %v497, %v496
    %v523 = vpack.c.b16 %v499, %v498
    %v524 = vpack.c.b16 %v501, %v500
    %v525 = vpack.c.b16 %v503, %v502
    %v526 = vpack.c.b16 %v505, %v504
    %v527 = vpack.c.b16 %v507, %v506
    %v528 = vpack.c.b16 %v509, %v508
    %v529 = vpack.c.b16 %v511, %v510
    %v530 = vpack.c.b16 %v513, %v512
    %v531 = vpack.c.b16 %v515, %v514
    %548 = vmatprep.subr.bf16.mxu0 0
    %549 = vmatpush1.bf16.msra.mxu0 %v516
    %550 = vmatprep.subr.bf16.mxu0 0
    %551 = vmatpush1.bf16.msra.mxu0 %v517
    %552 = vmatprep.subr.bf16.mxu0 0
    %553 = vmatpush1.bf16.msra.mxu0 %v518
    %554 = vmatprep.subr.bf16.mxu0 0
    %555 = vmatpush1.bf16.msra.mxu0 %v519
    %556 = vmatprep.subr.bf16.mxu0 0
    %557 = vmatpush1.bf16.msra.mxu0 %v520
    %558 = vmatprep.subr.bf16.mxu0 0
    %559 = vmatpush1.bf16.msra.mxu0 %v521
    %560 = vmatprep.subr.bf16.mxu0 0
    %561 = vmatpush1.bf16.msra.mxu0 %v522
    %562 = vmatprep.subr.bf16.mxu0 0
    %563 = vmatpush1.bf16.msra.mxu0 %v523
    %564 = vmatprep.subr.bf16.mxu0 0
    %565 = vmatpush1.bf16.msra.mxu0 %v524
    %566 = vmatprep.subr.bf16.mxu0 0
    %567 = vmatpush1.bf16.msra.mxu0 %v525
    %568 = vmatprep.subr.bf16.mxu0 0
    %569 = vmatpush1.bf16.msra.mxu0 %v526
    %570 = vmatprep.subr.bf16.mxu0 0
    %571 = vmatpush1.bf16.msra.mxu0 %v527
    %572 = vmatprep.subr.bf16.mxu0 0
    %573 = vmatpush1.bf16.msra.mxu0 %v528
    %574 = vmatprep.subr.bf16.mxu0 0
    %575 = vmatpush1.bf16.msra.mxu0 %v529
    %576 = vmatprep.subr.bf16.mxu0 0
    %577 = vmatpush1.bf16.msra.mxu0 %v530
    %578 = vmatprep.subr.bf16.mxu0 0
    %579 = vmatpush1.bf16.msra.mxu0 %v531
    %580 = vmatprep.mubr.bf16.mxu0 %v398
    %581 = vmatmul.mubr.bf16.gmra.mrb[0].mxu0 %v397
    %v582 = vpop.f32.mrb[0].mxu0
    %v583 = vadd.f32 %v450, %v582
    %v584 = vpop.f32.mrb[0].mxu0
    %v585 = vpop.f32.mrb[0].mxu0
    %v586 = vadd.f32 %v450, %v585
    %v587 = vpop.f32.mrb[0].mxu0
    %588 = vmatprep.mubr.bf16.mxu0 %v400
    %589 = vmatmul.mubr.bf16.gmra.mrb[0].mxu0 %v399
    %v590 = vpop.f32.mrb[0].mxu0
    %v591 = vadd.f32 %v450, %v590
    %v592 = vpop.f32.mrb[0].mxu0
    %v593 = vpop.f32.mrb[0].mxu0
    %v594 = vadd.f32 %v450, %v593
    %v595 = vpop.f32.mrb[0].mxu0
    %596 = vmatprep.mubr.bf16.mxu0 %v402
    %597 = vmatmul.mubr.bf16.gmra.mrb[0].mxu0 %v401
    %v598 = vpop.f32.mrb[0].mxu0
    %v599 = vadd.f32 %v450, %v598
    %v600 = vpop.f32.mrb[0].mxu0
    %v601 = vpop.f32.mrb[0].mxu0
    %v602 = vadd.f32 %v450, %v601
    %v603 = vpop.f32.mrb[0].mxu0
    %604 = vmatprep.mubr.bf16.mxu0 %v404
    %605 = vmatmul.mubr.bf16.gmra.mrb[0].mxu0 %v403
    %v606 = vpop.f32.mrb[0].mxu0
    %v607 = vadd.f32 %v450, %v606
    %v608 = vpop.f32.mrb[0].mxu0
    %v609 = vpop.f32.mrb[0].mxu0
    %v610 = vadd.f32 %v450, %v609
    %v611 = vpop.f32.mrb[0].mxu0
    %612 = vmatprep.mubr.bf16.mxu0 %v406
    %613 = vmatmul.mubr.bf16.gmra.mrb[0].mxu0 %v405
    %v614 = vpop.f32.mrb[0].mxu0
    %v615 = vadd.f32 %v450, %v614
    %v616 = vpop.f32.mrb[0].mxu0
    %v617 = vpop.f32.mrb[0].mxu0
    %v618 = vadd.f32 %v450, %v617
    %v619 = vpop.f32.mrb[0].mxu0
    %620 = vmatprep.mubr.bf16.mxu0 %v408
    %621 = vmatmul.mubr.bf16.gmra.mrb[0].mxu0 %v407
    %v622 = vpop.f32.mrb[0].mxu0
    %v623 = vadd.f32 %v450, %v622
    %v624 = vpop.f32.mrb[0].mxu0
    %v625 = vpop.f32.mrb[0].mxu0
    %v626 = vadd.f32 %v450, %v625
    %v627 = vpop.f32.mrb[0].mxu0
    %628 = vmatprep.mubr.bf16.mxu0 %v410
    %629 = vmatmul.mubr.bf16.gmra.mrb[0].mxu0 %v409
    %v630 = vpop.f32.mrb[0].mxu0
    %v631 = vadd.f32 %v450, %v630
    %v632 = vpop.f32.mrb[0].mxu0
    %v633 = vpop.f32.mrb[0].mxu0
    %v634 = vadd.f32 %v450, %v633
    %v635 = vpop.f32.mrb[0].mxu0
    %636 = vmatprep.mubr.bf16.mxu0 %v412
    %637 = vmatmul.mubr.bf16.gmra.mrb[0].mxu0 %v411
    %v638 = vpop.f32.mrb[0].mxu0
    %v639 = vadd.f32 %v450, %v638
    %v640 = vpop.f32.mrb[0].mxu0
    %v641 = vpop.f32.mrb[0].mxu0
    %v642 = vadd.f32 %v450, %v641
    %v643 = vpop.f32.mrb[0].mxu0
    %644 = vdwg.mxu0
    %v645 = vmax.f32 %v583, 0.0
    %v646 = vmax.f32 %v586, 0.0
    %v647 = vmax.f32 %v591, 0.0
    %v648 = vmax.f32 %v594, 0.0
    %v649 = vmax.f32 %v599, 0.0
    %v650 = vmax.f32 %v602, 0.0
    %v651 = vmax.f32 %v607, 0.0
    %v652 = vmax.f32 %v610, 0.0
    %v653 = vmax.f32 %v615, 0.0
    %v654 = vmax.f32 %v618, 0.0
    %v655 = vmax.f32 %v623, 0.0
    %v656 = vmax.f32 %v626, 0.0
    %v657 = vmax.f32 %v631, 0.0
    %v658 = vmax.f32 %v634, 0.0
    %v659 = vmax.f32 %v639, 0.0
    %v660 = vmax.f32 %v642, 0.0
    %v661 = vpack.c.bf16 %v646, %v645
    %v662 = vpack.c.bf16 %v648, %v647
    %v663 = vpack.c.bf16 %v650, %v649
    %v664 = vpack.c.bf16 %v652, %v651
    %v665 = vpack.c.bf16 %v654, %v653
    %v666 = vpack.c.bf16 %v656, %v655
    %v667 = vpack.c.bf16 %v658, %v657
    %v668 = vpack.c.bf16 %v660, %v659
    %v677 = vunpack.c.l.b16 %v661
    %v678 = vunpack.c.h.b16 %v661
    %v679 = vunpack.c.l.b16 %v662
    %v680 = vunpack.c.h.b16 %v662
    %v681 = vunpack.c.l.b16 %v663
    %v682 = vunpack.c.h.b16 %v663
    %v683 = vunpack.c.l.b16 %v664
    %v684 = vunpack.c.h.b16 %v664
    %v685 = vunpack.c.l.b16 %v665
    %v686 = vunpack.c.h.b16 %v665
    %v687 = vunpack.c.l.b16 %v666
    %v688 = vunpack.c.h.b16 %v666
    %v689 = vunpack.c.l.b16 %v667
    %v690 = vunpack.c.h.b16 %v667
    %v691 = vunpack.c.l.b16 %v668
    %v692 = vunpack.c.h.b16 %v668
    %v693 = vpack.c.b16 %v677, %v677
    %v694 = vpack.c.b16 %v678, %v678
    %v695 = vpack.c.b16 %v679, %v679
    %v696 = vpack.c.b16 %v680, %v680
    %v697 = vpack.c.b16 %v681, %v681
    %v698 = vpack.c.b16 %v682, %v682
    %v699 = vpack.c.b16 %v683, %v683
    %v700 = vpack.c.b16 %v684, %v684
    %v701 = vpack.c.b16 %v685, %v685
    %v702 = vpack.c.b16 %v686, %v686
    %v703 = vpack.c.b16 %v687, %v687
    %v704 = vpack.c.b16 %v688, %v688
    %v705 = vpack.c.b16 %v689, %v689
    %v706 = vpack.c.b16 %v690, %v690
    %v707 = vpack.c.b16 %v691, %v691
    %v708 = vpack.c.b16 %v692, %v692
    %725 = vst [vmem:[%s5] sm:$0xf] %v693
    %726 = vst [vmem:[%s5 + $0x4] sm:$0xf] %v694
    %727 = vst [vmem:[%s5 + $0x8] sm:$0xf] %v695
    %728 = vst [vmem:[%s5 + $0xc] sm:$0xf] %v696
    %729 = vst [vmem:[%s5 + $0x10] sm:$0xf] %v697
    %730 = vst [vmem:[%s5 + $0x14] sm:$0xf] %v698
    %731 = vst [vmem:[%s5 + $0x18] sm:$0xf] %v699
    %732 = vst [vmem:[%s5 + $0x1c] sm:$0xf] %v700
    %733 = vst [vmem:[%s5 + $0x20] sm:$0xf] %v701
    %734 = vst [vmem:[%s5 + $0x24] sm:$0xf] %v702
    %735 = vst [vmem:[%s5 + $0x28] sm:$0xf] %v703
    %736 = vst [vmem:[%s5 + $0x2c] sm:$0xf] %v704
    %737 = vst [vmem:[%s5 + $0x30] sm:$0xf] %v705
    %738 = vst [vmem:[%s5 + $0x34] sm:$0xf] %v706
    %739 = vst [vmem:[%s5 + $0x38] sm:$0xf] %v707
    %740 = vst [vmem:[%s5 + $0x3c] sm:$0xf] %v708
  $region29: #{gnn_forward.3} parent=0 // pred_fallthru
    _
  // Predicated region
  $region30: #{gnn_forward.3} parent=0 // pred_check
    _
  $region31: #{gnn_forward.3} parent=0 // pred_check_branch
    %742 = sbr.rel (0) target = $region33
  $region32: #{gnn_forward.3} parent=0 // pred_region
    _
  $region33: #{gnn_forward.3} parent=0 // pred_fallthru
    _
  // Predicated region
  $region34: #{gnn_forward.3} parent=0 // pred_check
    _
  $region35: #{gnn_forward.3} parent=0 // pred_check_branch
    %744 = sbr.rel (0) target = $region37
  $region36: #{gnn_forward.3} parent=0 // pred_region
    _
  $region37: #{gnn_forward.3} parent=0 // pred_fallthru
    _

</llo_original>
